<compile_context>
chip_gen: v6e
topology: v6e:2x2x1
jax: 0.10.0
libtpu: 0.0.40
codegen_flags: <defaults>
</compile_context>

<pallas_src>
import functools

import numpy as np
import jax
import jax.numpy as jnp
from jax import lax
from jax.experimental import pallas as pl
from jax.experimental.pallas import tpu as pltpu

LANE = 128           # channel padding (lane width / MXU N granularity)
MIN_ROW_TILE = 8     # keeps the (KH-1)-row halo re-read overhead small


@functools.lru_cache(maxsize=None)
def _hw_params():
    """(vmem_limit_bytes, target_m rows of the per-step matmul) per TPU gen."""
    vmem_cap = None
    try:
        info = pltpu.get_tpu_info()
        vmem_cap = getattr(info, "vmem_capacity_bytes", None)
    except Exception:
        vmem_cap = None
    if vmem_cap is not None and vmem_cap >= 96 * 1024 * 1024:
        # v5e / v6e class (128 MiB physical VMEM): bigger tiles, longer DMAs.
        return 80 * 1024 * 1024, 2048
    # v7x (64 MiB VMEM) or unknown backend: stay conservative.
    return 40 * 1024 * 1024, 1024


def _ceil_to(x, m):
    return ((x + m - 1) // m) * m


def _pick_row_tile(ho, wo, align, target_m):
    """Output rows per grid step: big matmul M-tile, small halo overhead."""
    th = -(-target_m // max(wo, 1))
    th = max(th, MIN_ROW_TILE)
    th = min(th, max(ho, 1))
    return _ceil_to(max(th, 1), align)


# ----------------------------------------------------------------------------
# Fused stride-1 KHxKW conv + (folded) BN + ReLU Pallas kernel
# ----------------------------------------------------------------------------
def _conv_bn_relu_kernel(cur_ref, halo_ref, w_ref, b_ref, o_ref, band_ref,
                         *, kh, kw):
    # cur_ref : (1, TH, WP, C)        bf16  rows [i*TH, (i+1)*TH) of padded input
    # halo_ref: (1, KH-1, WP, C)      bf16  rows [(i+1)*TH, (i+1)*TH + KH-1)
    # w_ref   : (KH*C, KW*Cout_p)     bf16  BN scale folded in, (ky,ci)x(kx,co)
    # b_ref   : (1, Cout_p)           f32
    # o_ref   : (1, TH, WO, Cout_p)   bf16
    # band_ref: (TH, WP, KH*C)        bf16  scratch: ky-grouped band
    th, wo, coutp = o_ref.shape[1], o_ref.shape[2], o_ref.shape[3]
    wp, c = cur_ref.shape[2], cur_ref.shape[3]

    # Build band[y, x, ky*C + ci] = input[y + ky, x, ci] from free row-offset
    # views of the cur tile plus the (KH-1)-row halo (no full-band concat).
    cur = cur_ref[0]                                  # (TH, WP, C)
    band_ref[:, :, 0:c] = cur
    if kh > 1:
        halo = halo_ref[0]                            # (KH-1, WP, C)
        for ky in range(1, kh):
            band_ref[0:th - ky, :, ky * c:(ky + 1) * c] = cur[ky:th]
            band_ref[th - ky:th, :, ky * c:(ky + 1) * c] = halo[0:ky]

    # One MXU matmul per grid step: K = KH*C, N = KW*Cout_p.
    x2 = band_ref[...].reshape(th * wp, kh * c)
    d = jnp.dot(x2, w_ref[...], preferred_element_type=jnp.float32)
    d = d.reshape(th, wp, kw * coutp)

    # kx tap shift applied on the f32 result (lane-aligned column slabs).
    acc = d[:, 0:wo, 0:coutp]
    for kx in range(1, kw):
        acc = acc + d[:, kx:kx + wo, kx * coutp:(kx + 1) * coutp]

    out = jnp.maximum(acc + b_ref[...], 0.0)
    o_ref[0] = out.astype(o_ref.dtype)


def _conv_call(xp, wf, bias_p, kh, kw, ho, wo):
    """Stride-1 kh x kw 'valid' conv of the zero-padded bf16 NHWC input xp."""
    n, hp, wp, c = xp.shape
    coutp = wf.shape[1] // kw
    vmem_limit, target_m = _hw_params()

    khm1 = max(kh - 1, 1)
    th = _pick_row_tile(ho, wo, khm1, target_m)
    n_tiles = -(-ho // th)
    ho_pad = n_tiles * th
    hp_need = ho_pad + khm1                  # halo rows past the last tile
    wp8 = _ceil_to(wp, 8)                    # sublane-friendly width
    if hp_need > hp or wp8 > wp:
        xp = jnp.pad(xp, ((0, 0), (0, max(hp_need - hp, 0)),
                          (0, wp8 - wp), (0, 0)))
    hp, wp = xp.shape[1], xp.shape[2]

    flops = 2 * n * n_tiles * th * wp * (kh * c) * (kw * coutp)
    bytes_accessed = (n * n_tiles * (th + khm1) * wp * c + wf.size) * 2 \
        + bias_p.size * 4 + n * ho_pad * wo * coutp * 2

    out = pl.pallas_call(
        functools.partial(_conv_bn_relu_kernel, kh=kh, kw=kw),
        out_shape=jax.ShapeDtypeStruct((n, ho_pad, wo, coutp), jnp.bfloat16),
        grid_spec=pltpu.PrefetchScalarGridSpec(
            num_scalar_prefetch=0,
            grid=(n_tiles, n),               # larger axis first (v7x megacore)
            in_specs=[
                pl.BlockSpec((1, th, wp, c), lambda i, b: (b, i, 0, 0)),
                # (KH-1)-row halo of the next tile: th is a multiple of (KH-1)
                # so (i+1)*(th//(KH-1)) is an exact block index.
                pl.BlockSpec((1, khm1, wp, c),
                             lambda i, b: (b, (i + 1) * (th // khm1), 0, 0)),
                pl.BlockSpec((kh * c, kw * coutp), lambda i, b: (0, 0)),
                pl.BlockSpec((1, coutp), lambda i, b: (0, 0)),
            ],
            out_specs=pl.BlockSpec((1, th, wo, coutp),
                                   lambda i, b: (b, i, 0, 0)),
            scratch_shapes=[pltpu.VMEM((th, wp, kh * c), jnp.bfloat16)],
        ),
        compiler_params=pltpu.CompilerParams(
            dimension_semantics=("parallel", "parallel"),
            vmem_limit_bytes=vmem_limit),
        cost_estimate=pl.CostEstimate(flops=flops, transcendentals=0,
                                      bytes_accessed=bytes_accessed),
    )(xp, xp, wf, bias_p)
    return out[:, :ho]


def conv3x3_bn_relu(x, w_oihw, scale, bias, stride):
    """ZeroPad2d(1) + Conv2d(k=3, stride, bias=False) + BN(eval) + ReLU.

    x: (N, H, W, Cin_p) bf16 with channels zero-padded to Cin_p (mult. of 128).
    Returns (N, Ho, Wo, Cout_p) bf16 (padded channels stay exactly zero).
    """
    n, h, w_, cinp = x.shape
    cout, cin = w_oihw.shape[0], w_oihw.shape[1]
    coutp = _ceil_to(cout, LANE)

    # Fold BN scale into the conv weight (kept in f32, cast once at the end).
    wt = jnp.transpose(w_oihw * scale[:, None, None, None], (2, 3, 1, 0))  # ky,kx,ci,co
    bias_p = jnp.pad(bias, (0, coutp - cout)).reshape(1, coutp).astype(jnp.float32)

    # TODO(synk): stem cin (4..64) is zero-padded to 128 lanes; a dedicated
    # small-cin path would cut the first layer's input DMA.
    xp = jnp.pad(x, ((0, 0), (1, 1), (1, 1), (0, 0)))    # ZeroPad2d(1)

    if stride == 1:
        wt = jnp.pad(wt, ((0, 0), (0, 0), (0, cinp - cin), (0, coutp - cout)))
        wf = jnp.transpose(wt, (0, 2, 1, 3)).reshape(3 * cinp, 3 * coutp)
        wf = wf.astype(jnp.bfloat16)
        return _conv_call(xp, wf, bias_p, 3, 3, h, w_)

    if stride == 2:
        # space-to-depth: stride-2 3x3 conv == stride-1 2x2 conv on 4x channels
        hp, wp = xp.shape[1], xp.shape[2]
        hp2, wp2 = _ceil_to(hp, 2), _ceil_to(wp, 2)
        xp = jnp.pad(xp, ((0, 0), (0, hp2 - hp), (0, wp2 - wp), (0, 0)))
        xs = xp.reshape(n, hp2 // 2, 2, wp2 // 2, 2, cinp)
        xs = jnp.transpose(xs, (0, 1, 3, 2, 4, 5)).reshape(
            n, hp2 // 2, wp2 // 2, 4 * cinp)
        # expanded weight: W'[A,B,py,px,ci,co] = W[2A+py, 2B+px, ci, co]
        # (taps with 2A+py > 2 or 2B+px > 2 are zero via the padding below).
        wq = jnp.pad(wt, ((0, 1), (0, 1), (0, cinp - cin), (0, coutp - cout)))
        wq = wq.reshape(2, 2, 2, 2, cinp, coutp)          # (A, py, B, px, ci, co)
        wq = jnp.transpose(wq, (0, 1, 3, 4, 2, 5))        # (A, py, px, ci, B, co)
        wf = wq.reshape(2 * 4 * cinp, 2 * coutp).astype(jnp.bfloat16)
        ho, wo = hp2 // 2 - 1, wp2 // 2 - 1
        return _conv_call(xs, wf, bias_p, 2, 2, ho, wo)

    # TODO(synk): layer strides other than 1/2 are not wired (pcdet uses 1/2).
    raise NotImplementedError(f"layer stride {stride} not supported")


# ----------------------------------------------------------------------------
# Fused ConvTranspose2d(kernel==stride) + BN + ReLU Pallas kernel
# ----------------------------------------------------------------------------
def _deconv_bn_relu_kernel(x_ref, w_ref, b_ref, o_ref, *, s):
    # x_ref: (1, TH, W, Cin_p) bf16
    # w_ref: (S, Cin_p, S*Cout_p) bf16  (BN scale folded; columns ordered (c, o))
    # b_ref: (1, S*Cout_p) f32          (bias tiled over the sub-column index c)
    # o_ref: (1, TH, S, W*S, Cout_p) bf16  -- (H, S) merged for free in HBM later
    th, w_, c = x_ref.shape[1], x_ref.shape[2], x_ref.shape[3]
    coutp = o_ref.shape[4]

    x2 = x_ref[0].reshape(th * w_, c)
    for a in range(s):
        d = jnp.dot(x2, w_ref[a], preferred_element_type=jnp.float32)
        z = jnp.maximum(d + b_ref[...], 0.0).astype(o_ref.dtype)
        # (TH*W, S*Cout_p) -> (TH, W*S, Cout_p): sub-pixel interleave along W,
        # written per a-slab (no in-kernel concatenate of the full output).
        o_ref[:, :, a:a + 1, :, :] = z.reshape(1, th, 1, w_ * s, coutp)


def deconv_bn_relu(x, w_iohw, scale, bias, s):
    """ConvTranspose2d(kernel=s, stride=s, bias=False) + BN(eval) + ReLU."""
    n, h, w_, cinp = x.shape
    cin, cout = w_iohw.shape[0], w_iohw.shape[1]
    coutp = _ceil_to(cout, LANE)
    vmem_limit, target_m = _hw_params()

    wt = jnp.transpose(w_iohw * scale[None, :, None, None], (2, 0, 3, 1))  # a,ci,c,co
    wt = jnp.pad(wt, ((0, 0), (0, cinp - cin), (0, 0), (0, coutp - cout)))
    wf = wt.reshape(s, cinp, s * coutp).astype(jnp.bfloat16)
    bias_p = jnp.tile(jnp.pad(bias, (0, coutp - cout)), s)
    bias_p = bias_p.reshape(1, s * coutp).astype(jnp.float32)

    th = _pick_row_tile(h, w_, 1, target_m)
    n_tiles = -(-h // th)
    h_pad = n_tiles * th
    if h_pad > h:
        x = jnp.pad(x, ((0, 0), (0, h_pad - h), (0, 0), (0, 0)))

    flops = 2 * n * h_pad * w_ * cinp * (s * s * coutp)
    bytes_accessed = x.size * 2 + wf.size * 2 + bias_p.size * 4 \
        + n * h_pad * s * w_ * s * coutp * 2

    out = pl.pallas_call(
        functools.partial(_deconv_bn_relu_kernel, s=s),
        out_shape=jax.ShapeDtypeStruct((n, h_pad, s, w_ * s, coutp),
                                       jnp.bfloat16),
        grid_spec=pltpu.PrefetchScalarGridSpec(
            num_scalar_prefetch=0,
            grid=(n_tiles, n),
            in_specs=[
                pl.BlockSpec((1, th, w_, cinp), lambda i, b: (b, i, 0, 0)),
                pl.BlockSpec((s, cinp, s * coutp), lambda i, b: (0, 0, 0)),
                pl.BlockSpec((1, s * coutp), lambda i, b: (0, 0)),
            ],
            out_specs=pl.BlockSpec((1, th, s, w_ * s, coutp),
                                   lambda i, b: (b, i, 0, 0, 0)),
        ),
        compiler_params=pltpu.CompilerParams(
            dimension_semantics=("parallel", "parallel"),
            vmem_limit_bytes=vmem_limit),
        cost_estimate=pl.CostEstimate(flops=flops, transcendentals=0,
                                      bytes_accessed=bytes_accessed),
    )(x, wf, bias_p)
    # (h, a) are adjacent row-major dims -> this reshape is free in HBM.
    out = out.reshape(n, h_pad * s, w_ * s, coutp)
    return out[:, :h * s]


# ----------------------------------------------------------------------------
# BaseBEVBackbone (Pallas/JAX version, deterministic synthetic parameters)
# ----------------------------------------------------------------------------
def _bn_affine(key, c, eps=1e-3):
    k1, k2, k3, k4 = jax.random.split(key, 4)
    gamma = jax.random.uniform(k1, (c,), minval=0.5, maxval=1.5)
    beta = 0.1 * jax.random.normal(k2, (c,))
    mean = 0.1 * jax.random.normal(k3, (c,))
    var = jax.random.uniform(k4, (c,), minval=0.5, maxval=1.5)
    scale = gamma / jnp.sqrt(var + eps)
    bias = beta - mean * scale
    return scale.astype(jnp.float32), bias.astype(jnp.float32)


class BaseBEVBackbonePallas:
    def __init__(self, model_cfg, input_channels, key):
        layer_nums = model_cfg.get('LAYER_NUMS', []) or []
        layer_strides = model_cfg.get('LAYER_STRIDES', []) or []
        num_filters = model_cfg.get('NUM_FILTERS', []) or []
        upsample_strides = model_cfg.get('UPSAMPLE_STRIDES', []) or []
        num_upsample_filters = model_cfg.get('NUM_UPSAMPLE_FILTERS', []) or []

        num_levels = len(layer_nums)
        c_in_list = [input_channels, *num_filters[:-1]]
        self.blocks = []     # list of list of (w_oihw, scale, bias, stride)
        self.deblocks = []   # list of (w_iohw, scale, bias, stride)

        for idx in range(num_levels):
            layers = []
            key, kw, kb = jax.random.split(key, 3)
            w = 0.1 * jax.random.normal(
                kw, (num_filters[idx], c_in_list[idx], 3, 3), jnp.float32)
            sc, b = _bn_affine(kb, num_filters[idx])
            layers.append((w, sc, b, layer_strides[idx]))
            for _ in range(layer_nums[idx]):
                key, kw, kb = jax.random.split(key, 3)
                w = 0.1 * jax.random.normal(
                    kw, (num_filters[idx], num_filters[idx], 3, 3), jnp.float32)
                sc, b = _bn_affine(kb, num_filters[idx])
                layers.append((w, sc, b, 1))
            self.blocks.append(layers)

            if len(upsample_strides) > 0:
                stride = upsample_strides[idx]
                # TODO(synk): stride < 1 deblock branch (strided Conv2d
                # downsample deblock) is not wired.
                assert stride >= 1, "fractional upsample stride not supported"
                key, kw, kb = jax.random.split(key, 3)
                w = 0.1 * jax.random.normal(
                    kw,
                    (num_filters[idx], num_upsample_filters[idx], stride, stride),
                    jnp.float32)
                sc, b = _bn_affine(kb, num_upsample_filters[idx])
                self.deblocks.append((w, sc, b, stride))

        # TODO(synk): extra final deblock when len(upsample_strides) > num_levels
        # and the domain-classifier / get_loss / remove_trg_data training paths
        # are data-pipeline glue with no kernel content; not implemented.
        self.num_bev_features = sum(num_upsample_filters)

    def forward(self, spatial_features_nchw):
        """spatial_features: (N, C, H, W) f32 -> spatial_features_2d (NCHW, f32)."""
        x = jnp.transpose(spatial_features_nchw, (0, 2, 3, 1))      # NHWC
        c_in = x.shape[-1]
        cinp = _ceil_to(c_in, LANE)
        x = jnp.pad(x, ((0, 0), (0, 0), (0, 0), (0, cinp - c_in)))
        x = x.astype(jnp.bfloat16)

        ups = []
        for i, block in enumerate(self.blocks):
            for (w, sc, b, st) in block:
                # TODO(synk): inter-layer pad/slice glue (ZeroPad2d + row-tile
                # padding) still round-trips HBM; could be folded into the
                # kernels with edge-tile masking.
                x = conv3x3_bn_relu(x, w, sc, b, st)
            if len(self.deblocks) > 0:
                dw, dsc, db, ds = self.deblocks[i]
                up = deconv_bn_relu(x, dw, dsc, db, ds)
                ups.append(up[..., :dw.shape[1]])      # drop channel padding
            else:
                ups.append(x[..., :block[-1][0].shape[0]])
        out = jnp.concatenate(ups, axis=-1) if len(ups) > 1 else ups[0]
        return jnp.transpose(out, (0, 3, 1, 2)).astype(jnp.float32)  # NCHW


# ----------------------------------------------------------------------------
# Pure-JAX (lax, f32) reference of the same forward, for correctness checking
# ----------------------------------------------------------------------------
def _ref_forward(model, x_nchw):
    def bn_relu(y, sc, b):
        return jnp.maximum(y * sc[None, :, None, None] + b[None, :, None, None], 0.0)

    x = x_nchw
    ups = []
    for i, block in enumerate(model.blocks):
        for (w, sc, b, st) in block:
            y = lax.conv_general_dilated(
                x, w, (st, st), [(1, 1), (1, 1)],
                dimension_numbers=('NCHW', 'OIHW', 'NCHW'),
                precision=lax.Precision.HIGHEST)
            x = bn_relu(y, sc, b)
        dw, dsc, db, ds = model.deblocks[i]
        n, ci, h, w_ = x.shape
        co = dw.shape[1]
        y = jnp.einsum('ncij,cdab->ndiajb', x, dw,
                       precision=lax.Precision.HIGHEST)
        y = y.reshape(n, co, h * ds, w_ * ds)
        ups.append(bn_relu(y, dsc, db))
    return jnp.concatenate(ups, axis=1)


if __name__ == "__main__":
    model_cfg = {
        'LAYER_NUMS': [1, 1],
        'LAYER_STRIDES': [1, 2],
        'NUM_FILTERS': [8, 16],
        'UPSAMPLE_STRIDES': [1, 2],
        'NUM_UPSAMPLE_FILTERS': [8, 8],
    }
    input_channels = 4
    key = jax.random.PRNGKey(0)
    key, k_in, k_param = jax.random.split(key, 3)

    spatial_features = jax.random.normal(k_in, (2, input_channels, 16, 16),
                                         jnp.float32)
    model = BaseBEVBackbonePallas(model_cfg, input_channels, k_param)

    out = model.forward(spatial_features)
    out = jax.block_until_ready(out)

    assert out.shape == (2, sum(model_cfg['NUM_UPSAMPLE_FILTERS']), 16, 16), out.shape

    ref = jax.block_until_ready(_ref_forward(model, spatial_features))
    np.testing.assert_allclose(np.asarray(out), np.asarray(ref),
                               rtol=5e-2, atol=5e-2)

    print("KERNEL_OK")
</pallas_src>

<mosaic_0001>
module attributes {stable_mosaic.version = 11 : i64} {
  func.func @_conv_bn_relu_kernel(%arg0: i32, %arg1: i32, %arg2: memref<1x16x24x128xbf16, #tpu.memory_space<vmem>>, %arg3: memref<1x2x24x128xbf16, #tpu.memory_space<vmem>>, %arg4: memref<384x384xbf16, #tpu.memory_space<vmem>>, %arg5: memref<1x128xf32, #tpu.memory_space<vmem>>, %arg6: memref<1x16x16x128xbf16, #tpu.memory_space<vmem>>, %arg7: memref<16x24x384xbf16, #tpu.memory_space<vmem>>) attributes {dimension_semantics = [#tpu.dimension_semantics<parallel>, #tpu.dimension_semantics<parallel>], iteration_bounds = array<i64: 1, 2>, scalar_prefetch = 0 : i64, scratch_operands = 1 : i64, tpu.core_type = #tpu.core_type<tc>, window_params = [{transform_indices = @transform_0, window_bounds = array<i64: 1, 16, 24, 128>}, {transform_indices = @transform_1, window_bounds = array<i64: 1, 2, 24, 128>}, {pipeline_mode = #tpu.pipeline_mode<synchronous>, transform_indices = @transform_2, window_bounds = array<i64: 384, 384>}, {pipeline_mode = #tpu.pipeline_mode<synchronous>, transform_indices = @transform_3, window_bounds = array<i64: 1, 128>}, {transform_indices = @transform_4, window_bounds = array<i64: 1, 16, 16, 128>}]} {
    %c0 = arith.constant 0 : index
    %c0_0 = arith.constant 0 : index
    %c0_1 = arith.constant 0 : index
    %c0_2 = arith.constant 0 : index
    %0 = vector.load %arg2[%c0, %c0_0, %c0_1, %c0_2] : memref<1x16x24x128xbf16, #tpu.memory_space<vmem>>, vector<1x16x24x128xbf16>
    %1 = vector.shape_cast %0 : vector<1x16x24x128xbf16> to vector<16x24x128xbf16>
    %c0_3 = arith.constant 0 : index
    %c0_4 = arith.constant 0 : index
    %c0_5 = arith.constant 0 : index
    %2 = vector.load %arg7[%c0_3, %c0_4, %c0_5] : memref<16x24x384xbf16, #tpu.memory_space<vmem>>, vector<16x24x128xbf16>
    tpu.vector_store %arg7[%c0_3, %c0_4, %c0_5], %1 {strides = array<i32>} : memref<16x24x384xbf16, #tpu.memory_space<vmem>>, vector<16x24x128xbf16>,
    %c0_6 = arith.constant 0 : index
    %c0_7 = arith.constant 0 : index
    %c0_8 = arith.constant 0 : index
    %c0_9 = arith.constant 0 : index
    %3 = vector.load %arg3[%c0_6, %c0_7, %c0_8, %c0_9] : memref<1x2x24x128xbf16, #tpu.memory_space<vmem>>, vector<1x2x24x128xbf16>
    %4 = vector.shape_cast %3 : vector<1x2x24x128xbf16> to vector<2x24x128xbf16>
    %5 = vector.extract_strided_slice %1 {offsets = [1, 0, 0], sizes = [15, 24, 128], strides = [1, 1, 1]} : vector<16x24x128xbf16> to vector<15x24x128xbf16>
    %c0_10 = arith.constant 0 : index
    %c0_11 = arith.constant 0 : index
    %c128 = arith.constant 128 : index
    %6 = vector.load %arg7[%c0_10, %c0_11, %c128] : memref<16x24x384xbf16, #tpu.memory_space<vmem>>, vector<15x24x128xbf16>
    tpu.vector_store %arg7[%c0_10, %c0_11, %c128], %5 {strides = array<i32>} : memref<16x24x384xbf16, #tpu.memory_space<vmem>>, vector<15x24x128xbf16>,
    %7 = vector.extract_strided_slice %4 {offsets = [0, 0, 0], sizes = [1, 24, 128], strides = [1, 1, 1]} : vector<2x24x128xbf16> to vector<1x24x128xbf16>
    %c15 = arith.constant 15 : index
    %c0_12 = arith.constant 0 : index
    %c128_13 = arith.constant 128 : index
    %8 = vector.load %arg7[%c15, %c0_12, %c128_13] : memref<16x24x384xbf16, #tpu.memory_space<vmem>>, vector<1x24x128xbf16>
    tpu.vector_store %arg7[%c15, %c0_12, %c128_13], %7 {strides = array<i32>} : memref<16x24x384xbf16, #tpu.memory_space<vmem>>, vector<1x24x128xbf16>,
    %9 = vector.extract_strided_slice %1 {offsets = [2, 0, 0], sizes = [14, 24, 128], strides = [1, 1, 1]} : vector<16x24x128xbf16> to vector<14x24x128xbf16>
    %c0_14 = arith.constant 0 : index
    %c0_15 = arith.constant 0 : index
    %c256 = arith.constant 256 : index
    %10 = vector.load %arg7[%c0_14, %c0_15, %c256] : memref<16x24x384xbf16, #tpu.memory_space<vmem>>, vector<14x24x128xbf16>
    tpu.vector_store %arg7[%c0_14, %c0_15, %c256], %9 {strides = array<i32>} : memref<16x24x384xbf16, #tpu.memory_space<vmem>>, vector<14x24x128xbf16>,
    %c14 = arith.constant 14 : index
    %c0_16 = arith.constant 0 : index
    %c256_17 = arith.constant 256 : index
    %11 = vector.load %arg7[%c14, %c0_16, %c256_17] : memref<16x24x384xbf16, #tpu.memory_space<vmem>>, vector<2x24x128xbf16>
    tpu.vector_store %arg7[%c14, %c0_16, %c256_17], %4 {strides = array<i32>} : memref<16x24x384xbf16, #tpu.memory_space<vmem>>, vector<2x24x128xbf16>,
    %c0_18 = arith.constant 0 : index
    %c0_19 = arith.constant 0 : index
    %c0_20 = arith.constant 0 : index
    %12 = vector.load %arg7[%c0_18, %c0_19, %c0_20] : memref<16x24x384xbf16, #tpu.memory_space<vmem>>, vector<16x24x384xbf16>
    %13 = vector.shape_cast %12 : vector<16x24x384xbf16> to vector<384x384xbf16>
    %c0_21 = arith.constant 0 : index
    %c0_22 = arith.constant 0 : index
    %14 = vector.load %arg4[%c0_21, %c0_22] : memref<384x384xbf16, #tpu.memory_space<vmem>>, vector<384x384xbf16>
    %cst = arith.constant dense<0.000000e+00> : vector<384x384xf32>
    %15 = tpu.matmul %13, %14, %cst {dimension_numbers = #tpu.dot_dimension_numbers<[1], [0], [0], [1], [0, 0, 1, 1], [], []>} : vector<384x384xbf16>, vector<384x384xbf16>, vector<384x384xf32> -> vector<384x384xf32>
    %16 = vector.shape_cast %15 : vector<384x384xf32> to vector<16x24x384xf32>
    %17 = vector.extract_strided_slice %16 {offsets = [0, 0, 0], sizes = [16, 16, 128], strides = [1, 1, 1]} : vector<16x24x384xf32> to vector<16x16x128xf32>
    %18 = vector.extract_strided_slice %16 {offsets = [0, 1, 128], sizes = [16, 16, 128], strides = [1, 1, 1]} : vector<16x24x384xf32> to vector<16x16x128xf32>
    %19 = arith.addf %17, %18 : vector<16x16x128xf32>
    %20 = vector.extract_strided_slice %16 {offsets = [0, 2, 256], sizes = [16, 16, 128], strides = [1, 1, 1]} : vector<16x24x384xf32> to vector<16x16x128xf32>
    %21 = arith.addf %19, %20 : vector<16x16x128xf32>
    %c0_23 = arith.constant 0 : index
    %c0_24 = arith.constant 0 : index
    %22 = vector.load %arg5[%c0_23, %c0_24] : memref<1x128xf32, #tpu.memory_space<vmem>>, vector<1x128xf32>
    %23 = vector.shape_cast %22 : vector<1x128xf32> to vector<1x1x128xf32>
    %24 = vector.broadcast %23 : vector<1x1x128xf32> to vector<16x16x128xf32>
    %25 = arith.addf %21, %24 : vector<16x16x128xf32>
    %cst_25 = arith.constant 0.000000e+00 : f32
    %26 = vector.broadcast %cst_25 : f32 to vector<16x16x128xf32>
    %27 = arith.maximumf %25, %26 : vector<16x16x128xf32>
    %28 = arith.truncf %27 : vector<16x16x128xf32> to vector<16x16x128xbf16>
    %c0_26 = arith.constant 0 : index
    %c0_27 = arith.constant 0 : index
    %c0_28 = arith.constant 0 : index
    %c0_29 = arith.constant 0 : index
    %29 = vector.load %arg6[%c0_26, %c0_27, %c0_28, %c0_29] : memref<1x16x16x128xbf16, #tpu.memory_space<vmem>>, vector<1x16x16x128xbf16>
    %30 = vector.shape_cast %29 : vector<1x16x16x128xbf16> to vector<16x16x128xbf16>
    %31 = vector.shape_cast %28 : vector<16x16x128xbf16> to vector<1x16x16x128xbf16>
    tpu.vector_store %arg6[%c0_26, %c0_27, %c0_28, %c0_29], %31 {strides = array<i32>} : memref<1x16x16x128xbf16, #tpu.memory_space<vmem>>, vector<1x16x16x128xbf16>,
    return
  }
  func.func @transform_0(%arg0: i32, %arg1: i32) -> (i32, i32, i32, i32) {
    %c0_i32 = arith.constant 0 : i32
    %c0_i32_0 = arith.constant 0 : i32
    %c0_i32_1 = arith.constant 0 : i32
    return %arg1, %arg0, %c0_i32, %c0_i32_0 : i32, i32, i32, i32
  }
  func.func @transform_1(%arg0: i32, %arg1: i32) -> (i32, i32, i32, i32) {
    %c1_i32 = arith.constant 1 : i32
    %0 = arith.addi %arg0, %c1_i32 : i32
    %c8_i32 = arith.constant 8 : i32
    %1 = arith.muli %0, %c8_i32 : i32
    %c0_i32 = arith.constant 0 : i32
    %c0_i32_0 = arith.constant 0 : i32
    %c0_i32_1 = arith.constant 0 : i32
    return %arg1, %1, %c0_i32, %c0_i32_0 : i32, i32, i32, i32
  }
  func.func @transform_2(%arg0: i32, %arg1: i32) -> (i32, i32) {
    %c0_i32 = arith.constant 0 : i32
    %c0_i32_0 = arith.constant 0 : i32
    %c0_i32_1 = arith.constant 0 : i32
    return %c0_i32, %c0_i32_0 : i32, i32
  }
  func.func @transform_3(%arg0: i32, %arg1: i32) -> (i32, i32) {
    %c0_i32 = arith.constant 0 : i32
    %c0_i32_0 = arith.constant 0 : i32
    %c0_i32_1 = arith.constant 0 : i32
    return %c0_i32, %c0_i32_0 : i32, i32
  }
  func.func @transform_4(%arg0: i32, %arg1: i32) -> (i32, i32, i32, i32) {
    %c0_i32 = arith.constant 0 : i32
    %c0_i32_0 = arith.constant 0 : i32
    %c0_i32_1 = arith.constant 0 : i32
    return %arg1, %arg0, %c0_i32, %c0_i32_0 : i32, i32, i32, i32
  }
}

</mosaic_0001>

<llo_original>
// kernel: tpu_custom_call.1
$region0: #{tpu_custom_call.1}
  #allocation0 [shape = 'u32[]', space=smem, size = 0x4, offset = 0x4, fixed_abs, tag = 'smem constant byte address 0x4 - core index']
  #allocation1 [shape = 'u32[144,128]{1,0:T(1,128)}', space=vmem, size = 0x12000, scoped, tag = 'internal scratch']
  #allocation2 [shape = 'bf16[16,24,384]{2,1,0:T(8,128)(2,1)}', space=vmem, size = 0x48000, scoped, tag = 'scratch operand']
  %s0 = inlined_call_operand.hbm [shape: bf16[2,18,24,128], index: 0, kind: input, shape index: {}]
  %s1 = inlined_call_operand.hbm [shape: bf16[2,18,24,128], index: 1, kind: input, shape index: {}]
  %s2 = inlined_call_operand.hbm [shape: bf16[384,384], index: 2, kind: input, shape index: {}]
  %s3 = inlined_call_operand.vmem [shape: f32[1,128], index: 3, kind: input, shape index: {}]
  %s4 = inlined_call_operand.hbm [shape: bf16[2,16,16,128], index: 4, kind: output, shape index: {}]
  %s5 = sld [smem:[#allocation0]]
  $region61: #{tpu_custom_call.1} parent=0
    _
  %s7 = ssub.s32 1, %s5
  %s8 = scalar_select 0, %s7, %s5
  $region1: #{tpu_custom_call.1} parent=0
    #allocation3 [shape = 'u8[196608]{0}', space=vmem, size = 0x30000, scoped, tag = 'input window, operand 0']
    #allocation4 [shape = 's32[2]{0}', space=sflag, size = 0x8, scoped, tag = 'scoped memory for tpu_custom_call.1']
    #allocation5 [shape = 's32[2]{0}', space=sflag, size = 0x8, scoped, tag = 'scoped memory for tpu_custom_call.1']
    #allocation6 [shape = 'u8[24576]{0}', space=vmem, size = 0x6000, scoped, tag = 'input window, operand 1']
    #allocation7 [shape = 's32[2]{0}', space=sflag, size = 0x8, scoped, tag = 'scoped memory for tpu_custom_call.1']
    #allocation8 [shape = 'u8[294912]{0}', space=vmem, size = 0x48000, scoped, tag = 'input window, operand 2, single buffered']
    #allocation9 [shape = 'u8[131072]{0}', space=vmem, size = 0x20000, scoped, tag = 'output window, operand 0']
    %9 = vsyncpa [#allocation4], 0
    %s10 = scalar_lea.sflag [#allocation4], 1
    %11 = vsyncpa %s10, 0
    %12 = vsyncpa [#allocation7], 0
    %s13 = scalar_lea.sflag [#allocation7], 1
    %14 = vsyncpa %s13, 0
    %15 = vsyncpa [#allocation5], 0
    %s16 = scalar_lea.sflag [#allocation5], 1
    %17 = vsyncpa %s16, 0
    loop: start=0, step=1, limit=4
    $region2: #{tpu_custom_call.1} parent=1 // loop_pre_header
      _
    $region3: #{tpu_custom_call.1} parent=1 // loop_header
      %s19 = sphi 0, %s23
      %p20 = scmp.ge.s32.totalorder %s19, 4
      %s26 = sphi 0, %s38
      %s27 = sphi 0, %s34
      %s28 = sphi 0, %s26
      %s29 = sphi 0, %s27
      %s30 = sphi 0, %s28
      %s31 = sphi 0, %s29
      %s43 = sphi 0, %s45
      %s46 = sphi 0, %s43
      %s47 = sphi 0, %s46
      %s63 = sphi 0, %s47
      %s75 = sphi 0, %s77
      %s78 = sphi 0, %s75
      %s79 = sphi 0, %s78
      %s95 = sphi 0, %s79
      %s99 = sphi 0, %s99
      %s101 = sphi 0, %s99
      %s102 = sphi 0, %s101
      %s116 = sphi 0, %s102
      %s120 = sphi 0, %s120
      %s122 = sphi 0, %s120
      %s123 = sphi 0, %s122
      %s137 = sphi 0, %s123
      %s145 = sphi 0, %s147
      %s148 = sphi 0, %s145
      %s149 = sphi 0, %s148
      %s165 = sphi 0, %s149
    $region4: #{tpu_custom_call.1} parent=1 // loop_header_branch
      %22 = sbr.rel (%p20) target = $region8
    $region5: #{tpu_custom_call.1} parent=1 // loop_body
      %s24 = ssub.s32 %s19, 1
      %s25 = ssub.s32 %s19, 2
      %s32 = sadd.s32 1, %s27
      %p33 = scmp.ge.s32.totalorder %s32, 2
      %s34 = scalar_select %p33, 0, %s32
      %s35 = sadd.s32 1, %s26
      %s36 = scalar_select %p33, %s35, %s26
      %p37 = scmp.ge.s32.totalorder %s36, 1
      %s38 = scalar_select %p37, 0, %s36
      %s39 = ssub.s32 %s27, %s34
      %s40 = ssub.s32 %s26, %s38
      %s41 = sor.u32 %s39, %s40
      %p42 = scmp.eq.s32.totalorder %s41, 0
      %s44 = sadd.s32 %s43, 1
      %s45 = scalar_select %p42, %s43, %s44
      %p48 = pneg %p42
      %p49 = scmp.eq.s32.totalorder %s19, 1
      %p50 = por %p48, %p49
      %p51 = scmp.ne.s32.totalorder %s43, %s46
      %p52 = scmp.eq.s32.totalorder %s19, 0
      %p53 = por %p51, %p52
      %p54 = scmp.ne.s32.totalorder %s43, %s46
      %p55 = scmp.eq.s32.totalorder %s24, 1
      %p56 = por %p54, %p55
      %p57 = scmp.ne.s32.totalorder %s46, %s47
      %p58 = scmp.eq.s32.totalorder %s24, 0
      %p59 = por %p57, %p58
      %p60 = scmp.ne.s32.totalorder %s46, %s47
      %p61 = scmp.eq.s32.totalorder %s25, 1
      %p62 = por %p60, %p61
      %p64 = scmp.ne.s32.totalorder %s47, %s63
      %p65 = scmp.eq.s32.totalorder %s25, 0
      %p66 = por %p64, %p65
      %s67 = sadd.s32 %s26, 1
      %s68 = smul.u32 %s67, 8
      %s69 = sadd.s32 %s38, 1
      %s70 = smul.u32 %s69, 8
      %s71 = ssub.s32 %s27, %s34
      %s72 = ssub.s32 %s68, %s70
      %s73 = sor.u32 %s71, %s72
      %p74 = scmp.eq.s32.totalorder %s73, 0
      %s76 = sadd.s32 %s75, 1
      %s77 = scalar_select %p74, %s75, %s76
      %p80 = pneg %p74
      %p81 = scmp.eq.s32.totalorder %s19, 1
      %p82 = por %p80, %p81
      %p83 = scmp.ne.s32.totalorder %s75, %s78
      %p84 = scmp.eq.s32.totalorder %s19, 0
      %p85 = por %p83, %p84
      %p86 = scmp.ne.s32.totalorder %s75, %s78
      %p87 = scmp.eq.s32.totalorder %s24, 1
      %p88 = por %p86, %p87
      %p89 = scmp.ne.s32.totalorder %s78, %s79
      %p90 = scmp.eq.s32.totalorder %s24, 0
      %p91 = por %p89, %p90
      %p92 = scmp.ne.s32.totalorder %s78, %s79
      %p93 = scmp.eq.s32.totalorder %s25, 1
      %p94 = por %p92, %p93
      %p96 = scmp.ne.s32.totalorder %s79, %s95
      %p97 = scmp.eq.s32.totalorder %s25, 0
      %p98 = por %p96, %p97
      %s100 = sadd.s32 %s99, 1
      %p103 = scmp.eq.s32.totalorder %s19, 1
      %p104 = scmp.ne.s32.totalorder %s99, %s101
      %p105 = scmp.eq.s32.totalorder %s19, 0
      %p106 = por %p104, %p105
      %p107 = scmp.ne.s32.totalorder %s99, %s101
      %p108 = scmp.eq.s32.totalorder %s24, 1
      %p109 = por %p107, %p108
      %p110 = scmp.ne.s32.totalorder %s101, %s102
      %p111 = scmp.eq.s32.totalorder %s24, 0
      %p112 = por %p110, %p111
      %p113 = scmp.ne.s32.totalorder %s101, %s102
      %p114 = scmp.eq.s32.totalorder %s25, 1
      %p115 = por %p113, %p114
      %p117 = scmp.ne.s32.totalorder %s102, %s116
      %p118 = scmp.eq.s32.totalorder %s25, 0
      %p119 = por %p117, %p118
      %s121 = sadd.s32 %s120, 1
      %p124 = scmp.eq.s32.totalorder %s19, 1
      %p125 = scmp.ne.s32.totalorder %s120, %s122
      %p126 = scmp.eq.s32.totalorder %s19, 0
      %p127 = por %p125, %p126
      %p128 = scmp.ne.s32.totalorder %s120, %s122
      %p129 = scmp.eq.s32.totalorder %s24, 1
      %p130 = por %p128, %p129
      %p131 = scmp.ne.s32.totalorder %s122, %s123
      %p132 = scmp.eq.s32.totalorder %s24, 0
      %p133 = por %p131, %p132
      %p134 = scmp.ne.s32.totalorder %s122, %s123
      %p135 = scmp.eq.s32.totalorder %s25, 1
      %p136 = por %p134, %p135
      %p138 = scmp.ne.s32.totalorder %s123, %s137
      %p139 = scmp.eq.s32.totalorder %s25, 0
      %p140 = por %p138, %p139
      %s141 = ssub.s32 %s27, %s34
      %s142 = ssub.s32 %s26, %s38
      %s143 = sor.u32 %s141, %s142
      %p144 = scmp.eq.s32.totalorder %s143, 0
      %s146 = sadd.s32 %s145, 1
      %s147 = scalar_select %p144, %s145, %s146
      %p150 = pneg %p144
      %p151 = scmp.eq.s32.totalorder %s19, 1
      %p152 = por %p150, %p151
      %p153 = scmp.ne.s32.totalorder %s145, %s148
      %p154 = scmp.eq.s32.totalorder %s19, 0
      %p155 = por %p153, %p154
      %p156 = scmp.ne.s32.totalorder %s145, %s148
      %p157 = scmp.eq.s32.totalorder %s24, 1
      %p158 = por %p156, %p157
      %p159 = scmp.ne.s32.totalorder %s148, %s149
      %p160 = scmp.eq.s32.totalorder %s24, 0
      %p161 = por %p159, %p160
      %p162 = scmp.ne.s32.totalorder %s148, %s149
      %p163 = scmp.eq.s32.totalorder %s25, 1
      %p164 = por %p162, %p163
      %p166 = scmp.ne.s32.totalorder %s149, %s165
      %p167 = scmp.eq.s32.totalorder %s25, 0
      %p168 = por %p166, %p167
      %p169 = scmp.le.s32.totalorder 1, %s19
      %p170 = scmp.lt.s32.totalorder %s19, 3
      %p171 = pnand %p169, %p170
      %p172 = pneg %p171
      // Predicated region
      $region9: #{tpu_custom_call.1} parent=5 // pred_check
        _
      $region10: #{tpu_custom_call.1} parent=5 // pred_check_branch
        %174 = sbr.rel (%p171) target = $region12
      $region11: #{tpu_custom_call.1} parent=5 // pred_region
        %s175 = ssub.s32 %s19, 1
        // Predicated region
        $region13: #{tpu_custom_call.1} parent=11 // pred_check
          %p176 = pneg %p112
        $region14: #{tpu_custom_call.1} parent=11 // pred_check_branch
          %178 = sbr.rel (%p176) target = $region16
        $region15: #{tpu_custom_call.1} parent=11 // pred_region
          %s180 = ssub.s32 9216, 9216
          %181 = vsyncadd [#allocation7], %s180
          %s182 = sshll.u32 [#allocation8], 4
          %s183 = int_to_ptr.vmem [resolvable:$true] %s182
          %188 = dma.hbm_to_vmem [thread:$0]  %s2, 9216, %s183, [#allocation7], 192, 192, 12
        $region16: #{tpu_custom_call.1} parent=11 // pred_fallthru
          _
        // Predicated region
        $region17: #{tpu_custom_call.1} parent=11 // pred_check
          %p189 = pneg %p133
        $region18: #{tpu_custom_call.1} parent=11 // pred_check_branch
          %191 = sbr.rel (%p189) target = $region20
        $region19: #{tpu_custom_call.1} parent=11 // pred_region
          _
        $region20: #{tpu_custom_call.1} parent=11 // pred_fallthru
          _
      $region12: #{tpu_custom_call.1} parent=5 // pred_fallthru
        _
      %p192 = scmp.lt.s32.totalorder %s19, 2
      // Predicated region
      $region21: #{tpu_custom_call.1} parent=5 // pred_check
        %p193 = pneg %p192
      $region22: #{tpu_custom_call.1} parent=5 // pred_check_branch
        %195 = sbr.rel (%p193) target = $region24
      $region23: #{tpu_custom_call.1} parent=5 // pred_region
        // Predicated region
        $region25: #{tpu_custom_call.1} parent=23 // pred_check
          %p196 = pneg %p53
        $region26: #{tpu_custom_call.1} parent=23 // pred_check_branch
          %198 = sbr.rel (%p196) target = $region28
        $region27: #{tpu_custom_call.1} parent=23 // pred_region
          %s199 = sand.u32 %s43, 1
          %s200 = scalar_lea.sflag [#allocation4], %s199
          %s201 = sand.u32 %s43, 1
          %s202 = smul.addr %s201, 192
          %s203 = scalar_lea.vmem [#allocation3], %s202
          %s204 = smul.u32 16, %s26
          %s205 = ssub.s32 18, %s204
          %p206 = scmp.lt.s32.totalorder %s205, 16
          %s207 = scalar_select %p206, %s205, 16
          %s208 = smul.u32 64, %s207
          %s209 = smul.u32 %s208, 3
          %s211 = ssub.s32 3072, %s209
          %212 = vsyncadd %s200, %s211
          %p213 = scmp.ne.s32.totalorder 0, %s209
          %s214 = smul.addr %s204, 3
          %s215 = smul.addr %s27, 54
          %s216 = sadd.s32 %s214, %s215
          %s217 = smul.addr %s216, 64
          %s218 = scalar_lea.hbm %s0, %s217
          %s219 = smul.u32 %s207, 3
          %s220 = smul.u32 4, %s219
          %s221 = sshll.u32 %s203, 4
          %s222 = int_to_ptr.vmem [resolvable:$true] %s221
          %s223 = sshll.u32 %s220, 4
          %227 = dma.hbm_to_vmem [thread:$0]  (%p213), %s218, %s223, %s222, %s200, 64, 64, 4
        $region28: #{tpu_custom_call.1} parent=23 // pred_fallthru
          _
        // Predicated region
        $region29: #{tpu_custom_call.1} parent=23 // pred_check
          %p228 = pneg %p85
        $region30: #{tpu_custom_call.1} parent=23 // pred_check_branch
          %230 = sbr.rel (%p228) target = $region32
        $region31: #{tpu_custom_call.1} parent=23 // pred_region
          %s231 = sand.u32 %s19, 1
          %s232 = scalar_lea.sflag [#allocation7], %s231
          %s233 = sand.u32 %s75, 1
          %s234 = smul.addr %s233, 24
          %s235 = scalar_lea.vmem [#allocation6], %s234
          %s236 = sadd.s32 %s26, 1
          %s237 = smul.u32 %s236, 8
          %s238 = smul.u32 2, %s237
          %s240 = ssub.s32 384, 384
          %241 = vsyncadd %s232, %s240
          %s242 = smul.addr %s238, 3
          %s243 = smul.addr %s27, 54
          %s244 = sadd.s32 %s242, %s243
          %s245 = smul.addr %s244, 64
          %s246 = scalar_lea.hbm %s1, %s245
          %s247 = sshll.u32 %s235, 4
          %s248 = int_to_ptr.vmem [resolvable:$true] %s247
          %253 = dma.hbm_to_vmem [thread:$0]  %s246, 384, %s248, %s232, 64, 64, 4
        $region32: #{tpu_custom_call.1} parent=23 // pred_fallthru
          _
      $region24: #{tpu_custom_call.1} parent=5 // pred_fallthru
        _
      %p254 = scmp.le.s32.totalorder 1, %s19
      %p255 = scmp.lt.s32.totalorder %s19, 3
      %p256 = pnand %p254, %p255
      %p257 = pneg %p256
      // Predicated region
      $region33: #{tpu_custom_call.1} parent=5 // pred_check
        _
      $region34: #{tpu_custom_call.1} parent=5 // pred_check_branch
        %259 = sbr.rel (%p256) target = $region36
      $region35: #{tpu_custom_call.1} parent=5 // pred_region
        %s260 = ssub.s32 %s19, 1
        %s261 = sand.u32 %s46, 1
        %s262 = scalar_lea.sflag [#allocation4], %s261
        %s263 = sand.u32 %s46, 1
        %s264 = smul.addr %s263, 192
        %s265 = scalar_lea.vmem [#allocation3], %s264
        // Predicated region
        $region37: #{tpu_custom_call.1} parent=35 // pred_check
          %p266 = pneg %p59
        $region38: #{tpu_custom_call.1} parent=35 // pred_check_branch
          %268 = sbr.rel (%p266) target = $region40
        $region39: #{tpu_custom_call.1} parent=35 // pred_region
          %269 = dma.done %s262, 3072
        $region40: #{tpu_custom_call.1} parent=35 // pred_fallthru
          _
        %s270 = sand.u32 %s24, 1
        %s271 = scalar_lea.sflag [#allocation7], %s270
        %s272 = sand.u32 %s78, 1
        %s273 = smul.addr %s272, 24
        %s274 = scalar_lea.vmem [#allocation6], %s273
        // Predicated region
        $region41: #{tpu_custom_call.1} parent=35 // pred_check
          %p275 = pneg %p91
        $region42: #{tpu_custom_call.1} parent=35 // pred_check_branch
          %277 = sbr.rel (%p275) target = $region44
        $region43: #{tpu_custom_call.1} parent=35 // pred_region
          %278 = dma.done %s271, 384
        $region44: #{tpu_custom_call.1} parent=35 // pred_fallthru
          _
        // Predicated region
        $region45: #{tpu_custom_call.1} parent=35 // pred_check
          %p279 = pneg %p112
        $region46: #{tpu_custom_call.1} parent=35 // pred_check_branch
          %281 = sbr.rel (%p279) target = $region48
        $region47: #{tpu_custom_call.1} parent=35 // pred_region
          %282 = dma.done [#allocation7], 9216
        $region48: #{tpu_custom_call.1} parent=35 // pred_fallthru
          _
        %s283 = sand.u32 %s46, 1
        %s284 = scalar_lea.sflag [#allocation4], %s283
        %s285 = sand.u32 %s46, 1
        %s286 = smul.addr %s285, 192
        %s287 = scalar_lea.vmem [#allocation3], %s286
        %p288 = pneg %p59
        %p289 = pneg %p56
        %s290 = sand.u32 %s24, 1
        %s291 = scalar_lea.sflag [#allocation7], %s290
        %s292 = sand.u32 %s78, 1
        %s293 = smul.addr %s292, 24
        %s294 = scalar_lea.vmem [#allocation6], %s293
        %p295 = pneg %p91
        %p296 = pneg %p88
        %p297 = pneg %p112
        %p298 = pneg %p109
        %p299 = pneg %p133
        %p300 = pneg %p130
        %p301 = pneg %p161
        %p302 = pneg %p158
        %s303 = sand.u32 %s148, 1
        %s304 = scalar_lea.sflag [#allocation5], %s303
        %s305 = sand.u32 %s148, 1
        %s306 = smul.addr %s305, 128
        %s307 = scalar_lea.vmem [#allocation9], %s306
        %s308 = smul.u32 16, %s28
        %s309 = ssub.s32 18, %s308
        %p310 = scmp.lt.s32.totalorder %s309, 16
        %s311 = scalar_select %p310, %s309, 16
        %s312 = smul.u32 64, %s311
        %s313 = smul.u32 %s312, 3
        %s314 = sadd.s32 %s28, 1
        %s315 = smul.u32 %s314, 8
        %s316 = smul.u32 2, %s315
        %s317 = smul.u32 16, %s28
        %v319 = vld [vmem:[%s265] sm:$0xf]
        %v320 = vld [vmem:[%s265 + $0x4] sm:$0xf]
        %v321 = vld [vmem:[%s265 + $0x8] sm:$0xf]
        %v322 = vld [vmem:[%s265 + $0xc] sm:$0xf]
        %v323 = vld [vmem:[%s265 + $0x10] sm:$0xf]
        %v324 = vld [vmem:[%s265 + $0x14] sm:$0xf]
        %v325 = vld [vmem:[%s265 + $0x18] sm:$0xf]
        %v326 = vld [vmem:[%s265 + $0x1c] sm:$0xf]
        %v327 = vld [vmem:[%s265 + $0x20] sm:$0xf]
        %v328 = vld [vmem:[%s265 + $0x24] sm:$0xf]
        %v329 = vld [vmem:[%s265 + $0x28] sm:$0xf]
        %v330 = vld [vmem:[%s265 + $0x2c] sm:$0xf]
        %v331 = vld [vmem:[%s265 + $0x30] sm:$0xf]
        %v332 = vld [vmem:[%s265 + $0x34] sm:$0xf]
        %v333 = vld [vmem:[%s265 + $0x38] sm:$0xf]
        %v334 = vld [vmem:[%s265 + $0x3c] sm:$0xf]
        %v335 = vld [vmem:[%s265 + $0x40] sm:$0xf]
        %v336 = vld [vmem:[%s265 + $0x44] sm:$0xf]
        %v337 = vld [vmem:[%s265 + $0x48] sm:$0xf]
        %v338 = vld [vmem:[%s265 + $0x4c] sm:$0xf]
        %v339 = vld [vmem:[%s265 + $0x50] sm:$0xf]
        %v340 = vld [vmem:[%s265 + $0x54] sm:$0xf]
        %v341 = vld [vmem:[%s265 + $0x58] sm:$0xf]
        %v342 = vld [vmem:[%s265 + $0x5c] sm:$0xf]
        %v343 = vld [vmem:[%s265 + $0x60] sm:$0xf]
        %v344 = vld [vmem:[%s265 + $0x64] sm:$0xf]
        %v345 = vld [vmem:[%s265 + $0x68] sm:$0xf]
        %v346 = vld [vmem:[%s265 + $0x6c] sm:$0xf]
        %v347 = vld [vmem:[%s265 + $0x70] sm:$0xf]
        %v348 = vld [vmem:[%s265 + $0x74] sm:$0xf]
        %v349 = vld [vmem:[%s265 + $0x78] sm:$0xf]
        %v350 = vld [vmem:[%s265 + $0x7c] sm:$0xf]
        %v351 = vld [vmem:[%s265 + $0x80] sm:$0xf]
        %v352 = vld [vmem:[%s265 + $0x84] sm:$0xf]
        %v353 = vld [vmem:[%s265 + $0x88] sm:$0xf]
        %v354 = vld [vmem:[%s265 + $0x8c] sm:$0xf]
        %v355 = vld [vmem:[%s265 + $0x90] sm:$0xf]
        %v356 = vld [vmem:[%s265 + $0x94] sm:$0xf]
        %v357 = vld [vmem:[%s265 + $0x98] sm:$0xf]
        %v358 = vld [vmem:[%s265 + $0x9c] sm:$0xf]
        %v359 = vld [vmem:[%s265 + $0xa0] sm:$0xf]
        %v360 = vld [vmem:[%s265 + $0xa4] sm:$0xf]
        %v361 = vld [vmem:[%s265 + $0xa8] sm:$0xf]
        %v362 = vld [vmem:[%s265 + $0xac] sm:$0xf]
        %v363 = vld [vmem:[%s265 + $0xb0] sm:$0xf]
        %v364 = vld [vmem:[%s265 + $0xb4] sm:$0xf]
        %v365 = vld [vmem:[%s265 + $0xb8] sm:$0xf]
        %v366 = vld [vmem:[%s265 + $0xbc] sm:$0xf]
        %367 = vst [vmem:[#allocation2] sm:$0xf] %v319
        %368 = vst [vmem:[#allocation2 + $0xc] sm:$0xf] %v320
        %369 = vst [vmem:[#allocation2 + $0x18] sm:$0xf] %v321
        %370 = vst [vmem:[#allocation2 + $0x24] sm:$0xf] %v322
        %371 = vst [vmem:[#allocation2 + $0x30] sm:$0xf] %v323
        %372 = vst [vmem:[#allocation2 + $0x3c] sm:$0xf] %v324
        %373 = vst [vmem:[#allocation2 + $0x48] sm:$0xf] %v325
        %374 = vst [vmem:[#allocation2 + $0x54] sm:$0xf] %v326
        %375 = vst [vmem:[#allocation2 + $0x60] sm:$0xf] %v327
        %376 = vst [vmem:[#allocation2 + $0x6c] sm:$0xf] %v328
        %377 = vst [vmem:[#allocation2 + $0x78] sm:$0xf] %v329
        %378 = vst [vmem:[#allocation2 + $0x84] sm:$0xf] %v330
        %379 = vst [vmem:[#allocation2 + $0x90] sm:$0xf] %v331
        %380 = vst [vmem:[#allocation2 + $0x9c] sm:$0xf] %v332
        %381 = vst [vmem:[#allocation2 + $0xa8] sm:$0xf] %v333
        %382 = vst [vmem:[#allocation2 + $0xb4] sm:$0xf] %v334
        %383 = vst [vmem:[#allocation2 + $0xc0] sm:$0xf] %v335
        %384 = vst [vmem:[#allocation2 + $0xcc] sm:$0xf] %v336
        %385 = vst [vmem:[#allocation2 + $0xd8] sm:$0xf] %v337
        %386 = vst [vmem:[#allocation2 + $0xe4] sm:$0xf] %v338
        %387 = vst [vmem:[#allocation2 + $0xf0] sm:$0xf] %v339
        %388 = vst [vmem:[#allocation2 + $0xfc] sm:$0xf] %v340
        %389 = vst [vmem:[#allocation2 + $0x108] sm:$0xf] %v341
        %390 = vst [vmem:[#allocation2 + $0x114] sm:$0xf] %v342
        %391 = vst [vmem:[#allocation2 + $0x120] sm:$0xf] %v343
        %392 = vst [vmem:[#allocation2 + $0x12c] sm:$0xf] %v344
        %393 = vst [vmem:[#allocation2 + $0x138] sm:$0xf] %v345
        %394 = vst [vmem:[#allocation2 + $0x144] sm:$0xf] %v346
        %395 = vst [vmem:[#allocation2 + $0x150] sm:$0xf] %v347
        %396 = vst [vmem:[#allocation2 + $0x15c] sm:$0xf] %v348
        %397 = vst [vmem:[#allocation2 + $0x168] sm:$0xf] %v349
        %398 = vst [vmem:[#allocation2 + $0x174] sm:$0xf] %v350
        %399 = vst [vmem:[#allocation2 + $0x180] sm:$0xf] %v351
        %400 = vst [vmem:[#allocation2 + $0x18c] sm:$0xf] %v352
        %401 = vst [vmem:[#allocation2 + $0x198] sm:$0xf] %v353
        %402 = vst [vmem:[#allocation2 + $0x1a4] sm:$0xf] %v354
        %403 = vst [vmem:[#allocation2 + $0x1b0] sm:$0xf] %v355
        %404 = vst [vmem:[#allocation2 + $0x1bc] sm:$0xf] %v356
        %405 = vst [vmem:[#allocation2 + $0x1c8] sm:$0xf] %v357
        %406 = vst [vmem:[#allocation2 + $0x1d4] sm:$0xf] %v358
        %407 = vst [vmem:[#allocation2 + $0x1e0] sm:$0xf] %v359
        %408 = vst [vmem:[#allocation2 + $0x1ec] sm:$0xf] %v360
        %409 = vst [vmem:[#allocation2 + $0x1f8] sm:$0xf] %v361
        %410 = vst [vmem:[#allocation2 + $0x204] sm:$0xf] %v362
        %411 = vst [vmem:[#allocation2 + $0x210] sm:$0xf] %v363
        %412 = vst [vmem:[#allocation2 + $0x21c] sm:$0xf] %v364
        %413 = vst [vmem:[#allocation2 + $0x228] sm:$0xf] %v365
        %414 = vst [vmem:[#allocation2 + $0x234] sm:$0xf] %v366
        %v415 = vld [vmem:[%s274] sm:$0xf]
        %v416 = vld [vmem:[%s274 + $0x4] sm:$0xf]
        %v417 = vld [vmem:[%s274 + $0x8] sm:$0xf]
        %v418 = vld [vmem:[%s274 + $0xc] sm:$0xf]
        %v419 = vld [vmem:[%s274 + $0x10] sm:$0xf]
        %v420 = vld [vmem:[%s274 + $0x14] sm:$0xf]
        %421 = vst [vmem:[#allocation2 + $0x4] sm:$0xf] %v322
        %422 = vst [vmem:[#allocation2 + $0x10] sm:$0xf] %v323
        %423 = vst [vmem:[#allocation2 + $0x1c] sm:$0xf] %v324
        %424 = vst [vmem:[#allocation2 + $0x28] sm:$0xf] %v325
        %425 = vst [vmem:[#allocation2 + $0x34] sm:$0xf] %v326
        %426 = vst [vmem:[#allocation2 + $0x40] sm:$0xf] %v327
        %427 = vst [vmem:[#allocation2 + $0x4c] sm:$0xf] %v328
        %428 = vst [vmem:[#allocation2 + $0x58] sm:$0xf] %v329
        %429 = vst [vmem:[#allocation2 + $0x64] sm:$0xf] %v330
        %430 = vst [vmem:[#allocation2 + $0x70] sm:$0xf] %v331
        %431 = vst [vmem:[#allocation2 + $0x7c] sm:$0xf] %v332
        %432 = vst [vmem:[#allocation2 + $0x88] sm:$0xf] %v333
        %433 = vst [vmem:[#allocation2 + $0x94] sm:$0xf] %v334
        %434 = vst [vmem:[#allocation2 + $0xa0] sm:$0xf] %v335
        %435 = vst [vmem:[#allocation2 + $0xac] sm:$0xf] %v336
        %436 = vst [vmem:[#allocation2 + $0xb8] sm:$0xf] %v337
        %437 = vst [vmem:[#allocation2 + $0xc4] sm:$0xf] %v338
        %438 = vst [vmem:[#allocation2 + $0xd0] sm:$0xf] %v339
        %439 = vst [vmem:[#allocation2 + $0xdc] sm:$0xf] %v340
        %440 = vst [vmem:[#allocation2 + $0xe8] sm:$0xf] %v341
        %441 = vst [vmem:[#allocation2 + $0xf4] sm:$0xf] %v342
        %442 = vst [vmem:[#allocation2 + $0x100] sm:$0xf] %v343
        %443 = vst [vmem:[#allocation2 + $0x10c] sm:$0xf] %v344
        %444 = vst [vmem:[#allocation2 + $0x118] sm:$0xf] %v345
        %445 = vst [vmem:[#allocation2 + $0x124] sm:$0xf] %v346
        %446 = vst [vmem:[#allocation2 + $0x130] sm:$0xf] %v347
        %447 = vst [vmem:[#allocation2 + $0x13c] sm:$0xf] %v348
        %448 = vst [vmem:[#allocation2 + $0x148] sm:$0xf] %v349
        %449 = vst [vmem:[#allocation2 + $0x154] sm:$0xf] %v350
        %450 = vst [vmem:[#allocation2 + $0x160] sm:$0xf] %v351
        %451 = vst [vmem:[#allocation2 + $0x16c] sm:$0xf] %v352
        %452 = vst [vmem:[#allocation2 + $0x178] sm:$0xf] %v353
        %453 = vst [vmem:[#allocation2 + $0x184] sm:$0xf] %v354
        %454 = vst [vmem:[#allocation2 + $0x190] sm:$0xf] %v355
        %455 = vst [vmem:[#allocation2 + $0x19c] sm:$0xf] %v356
        %456 = vst [vmem:[#allocation2 + $0x1a8] sm:$0xf] %v357
        %457 = vst [vmem:[#allocation2 + $0x1b4] sm:$0xf] %v358
        %458 = vst [vmem:[#allocation2 + $0x1c0] sm:$0xf] %v359
        %459 = vst [vmem:[#allocation2 + $0x1cc] sm:$0xf] %v360
        %460 = vst [vmem:[#allocation2 + $0x1d8] sm:$0xf] %v361
        %461 = vst [vmem:[#allocation2 + $0x1e4] sm:$0xf] %v362
        %462 = vst [vmem:[#allocation2 + $0x1f0] sm:$0xf] %v363
        %463 = vst [vmem:[#allocation2 + $0x1fc] sm:$0xf] %v364
        %464 = vst [vmem:[#allocation2 + $0x208] sm:$0xf] %v365
        %465 = vst [vmem:[#allocation2 + $0x214] sm:$0xf] %v366
        %s466 = scalar_lea.vmem [#allocation2], 540
        %467 = vst [vmem:[%s466 + $0x4] sm:$0xf] %v415
        %468 = vst [vmem:[%s466 + $0x10] sm:$0xf] %v416
        %469 = vst [vmem:[%s466 + $0x1c] sm:$0xf] %v417
        %470 = vst [vmem:[#allocation2 + $0x8] sm:$0xf] %v325
        %471 = vst [vmem:[#allocation2 + $0x14] sm:$0xf] %v326
        %472 = vst [vmem:[#allocation2 + $0x20] sm:$0xf] %v327
        %473 = vst [vmem:[#allocation2 + $0x2c] sm:$0xf] %v328
        %474 = vst [vmem:[#allocation2 + $0x38] sm:$0xf] %v329
        %475 = vst [vmem:[#allocation2 + $0x44] sm:$0xf] %v330
        %476 = vst [vmem:[#allocation2 + $0x50] sm:$0xf] %v331
        %477 = vst [vmem:[#allocation2 + $0x5c] sm:$0xf] %v332
        %478 = vst [vmem:[#allocation2 + $0x68] sm:$0xf] %v333
        %479 = vst [vmem:[#allocation2 + $0x74] sm:$0xf] %v334
        %480 = vst [vmem:[#allocation2 + $0x80] sm:$0xf] %v335
        %481 = vst [vmem:[#allocation2 + $0x8c] sm:$0xf] %v336
        %482 = vst [vmem:[#allocation2 + $0x98] sm:$0xf] %v337
        %483 = vst [vmem:[#allocation2 + $0xa4] sm:$0xf] %v338
        %484 = vst [vmem:[#allocation2 + $0xb0] sm:$0xf] %v339
        %485 = vst [vmem:[#allocation2 + $0xbc] sm:$0xf] %v340
        %486 = vst [vmem:[#allocation2 + $0xc8] sm:$0xf] %v341
        %487 = vst [vmem:[#allocation2 + $0xd4] sm:$0xf] %v342
        %488 = vst [vmem:[#allocation2 + $0xe0] sm:$0xf] %v343
        %489 = vst [vmem:[#allocation2 + $0xec] sm:$0xf] %v344
        %490 = vst [vmem:[#allocation2 + $0xf8] sm:$0xf] %v345
        %491 = vst [vmem:[#allocation2 + $0x104] sm:$0xf] %v346
        %492 = vst [vmem:[#allocation2 + $0x110] sm:$0xf] %v347
        %493 = vst [vmem:[#allocation2 + $0x11c] sm:$0xf] %v348
        %494 = vst [vmem:[#allocation2 + $0x128] sm:$0xf] %v349
        %495 = vst [vmem:[#allocation2 + $0x134] sm:$0xf] %v350
        %496 = vst [vmem:[#allocation2 + $0x140] sm:$0xf] %v351
        %497 = vst [vmem:[#allocation2 + $0x14c] sm:$0xf] %v352
        %498 = vst [vmem:[#allocation2 + $0x158] sm:$0xf] %v353
        %499 = vst [vmem:[#allocation2 + $0x164] sm:$0xf] %v354
        %500 = vst [vmem:[#allocation2 + $0x170] sm:$0xf] %v355
        %501 = vst [vmem:[#allocation2 + $0x17c] sm:$0xf] %v356
        %502 = vst [vmem:[#allocation2 + $0x188] sm:$0xf] %v357
        %503 = vst [vmem:[#allocation2 + $0x194] sm:$0xf] %v358
        %504 = vst [vmem:[#allocation2 + $0x1a0] sm:$0xf] %v359
        %505 = vst [vmem:[#allocation2 + $0x1ac] sm:$0xf] %v360
        %506 = vst [vmem:[#allocation2 + $0x1b8] sm:$0xf] %v361
        %507 = vst [vmem:[#allocation2 + $0x1c4] sm:$0xf] %v362
        %508 = vst [vmem:[#allocation2 + $0x1d0] sm:$0xf] %v363
        %509 = vst [vmem:[#allocation2 + $0x1dc] sm:$0xf] %v364
        %510 = vst [vmem:[#allocation2 + $0x1e8] sm:$0xf] %v365
        %511 = vst [vmem:[#allocation2 + $0x1f4] sm:$0xf] %v366
        %s512 = scalar_lea.vmem [#allocation2], 504
        %513 = vst [vmem:[%s512 + $0x8] sm:$0xf] %v415
        %514 = vst [vmem:[%s512 + $0x14] sm:$0xf] %v416
        %515 = vst [vmem:[%s512 + $0x20] sm:$0xf] %v417
        %516 = vst [vmem:[%s512 + $0x2c] sm:$0xf] %v418
        %517 = vst [vmem:[%s512 + $0x38] sm:$0xf] %v419
        %518 = vst [vmem:[%s512 + $0x44] sm:$0xf] %v420
        %v519 = vld [vmem:[#allocation2] sm:$0xff]
        %v520 = vld [vmem:[#allocation2 + $0x8] sm:$0xf]
        %v521 = vld [vmem:[#allocation2 + $0xc] sm:$0xff]
        %v522 = vld [vmem:[#allocation2 + $0x14] sm:$0xf]
        %v523 = vld [vmem:[#allocation2 + $0x18] sm:$0xff]
        %v524 = vld [vmem:[#allocation2 + $0x20] sm:$0xf]
        %v525 = vld [vmem:[#allocation2 + $0x24] sm:$0xff]
        %v526 = vld [vmem:[#allocation2 + $0x2c] sm:$0xf]
        %v527 = vld [vmem:[#allocation2 + $0x30] sm:$0xff]
        %v528 = vld [vmem:[#allocation2 + $0x38] sm:$0xf]
        %v529 = vld [vmem:[#allocation2 + $0x3c] sm:$0xff]
        %v530 = vld [vmem:[#allocation2 + $0x44] sm:$0xf]
        %v531 = vld [vmem:[#allocation2 + $0x48] sm:$0xff]
        %v532 = vld [vmem:[#allocation2 + $0x50] sm:$0xf]
        %v533 = vld [vmem:[#allocation2 + $0x54] sm:$0xff]
        %v534 = vld [vmem:[#allocation2 + $0x5c] sm:$0xf]
        %v535 = vld [vmem:[#allocation2 + $0x60] sm:$0xff]
        %v536 = vld [vmem:[#allocation2 + $0x68] sm:$0xf]
        %v537 = vld [vmem:[#allocation2 + $0x6c] sm:$0xff]
        %v538 = vld [vmem:[#allocation2 + $0x74] sm:$0xf]
        %v539 = vld [vmem:[#allocation2 + $0x78] sm:$0xff]
        %v540 = vld [vmem:[#allocation2 + $0x80] sm:$0xf]
        %v541 = vld [vmem:[#allocation2 + $0x84] sm:$0xff]
        %v542 = vld [vmem:[#allocation2 + $0x8c] sm:$0xf]
        %v543 = vld [vmem:[#allocation2 + $0x90] sm:$0xff]
        %v544 = vld [vmem:[#allocation2 + $0x98] sm:$0xf]
        %v545 = vld [vmem:[#allocation2 + $0x9c] sm:$0xff]
        %v546 = vld [vmem:[#allocation2 + $0xa4] sm:$0xf]
        %v547 = vld [vmem:[#allocation2 + $0xa8] sm:$0xff]
        %v548 = vld [vmem:[#allocation2 + $0xb0] sm:$0xf]
        %v549 = vld [vmem:[#allocation2 + $0xb4] sm:$0xff]
        %v550 = vld [vmem:[#allocation2 + $0xbc] sm:$0xf]
        %v551 = vld [vmem:[#allocation2 + $0xc0] sm:$0xff]
        %v552 = vld [vmem:[#allocation2 + $0xc8] sm:$0xf]
        %v553 = vld [vmem:[#allocation2 + $0xcc] sm:$0xff]
        %v554 = vld [vmem:[#allocation2 + $0xd4] sm:$0xf]
        %v555 = vld [vmem:[#allocation2 + $0xd8] sm:$0xff]
        %v556 = vld [vmem:[#allocation2 + $0xe0] sm:$0xf]
        %v557 = vld [vmem:[#allocation2 + $0xe4] sm:$0xff]
        %v558 = vld [vmem:[#allocation2 + $0xec] sm:$0xf]
        %v559 = vld [vmem:[#allocation2 + $0xf0] sm:$0xff]
        %v560 = vld [vmem:[#allocation2 + $0xf8] sm:$0xf]
        %v561 = vld [vmem:[#allocation2 + $0xfc] sm:$0xff]
        %v562 = vld [vmem:[#allocation2 + $0x104] sm:$0xf]
        %v563 = vld [vmem:[#allocation2 + $0x108] sm:$0xff]
        %v564 = vld [vmem:[#allocation2 + $0x110] sm:$0xf]
        %v565 = vld [vmem:[#allocation2 + $0x114] sm:$0xff]
        %v566 = vld [vmem:[#allocation2 + $0x11c] sm:$0xf]
        %v567 = vld [vmem:[#allocation2 + $0x120] sm:$0xff]
        %v568 = vld [vmem:[#allocation2 + $0x128] sm:$0xf]
        %v569 = vld [vmem:[#allocation2 + $0x12c] sm:$0xff]
        %v570 = vld [vmem:[#allocation2 + $0x134] sm:$0xf]
        %v571 = vld [vmem:[#allocation2 + $0x138] sm:$0xff]
        %v572 = vld [vmem:[#allocation2 + $0x140] sm:$0xf]
        %v573 = vld [vmem:[#allocation2 + $0x144] sm:$0xff]
        %v574 = vld [vmem:[#allocation2 + $0x14c] sm:$0xf]
        %v575 = vld [vmem:[#allocation2 + $0x150] sm:$0xff]
        %v576 = vld [vmem:[#allocation2 + $0x158] sm:$0xf]
        %v577 = vld [vmem:[#allocation2 + $0x15c] sm:$0xff]
        %v578 = vld [vmem:[#allocation2 + $0x164] sm:$0xf]
        %v579 = vld [vmem:[#allocation2 + $0x168] sm:$0xff]
        %v580 = vld [vmem:[#allocation2 + $0x170] sm:$0xf]
        %v581 = vld [vmem:[#allocation2 + $0x174] sm:$0xff]
        %v582 = vld [vmem:[#allocation2 + $0x17c] sm:$0xf]
        %v583 = vld [vmem:[#allocation2 + $0x180] sm:$0xff]
        %v584 = vld [vmem:[#allocation2 + $0x188] sm:$0xf]
        %v585 = vld [vmem:[#allocation2 + $0x18c] sm:$0xff]
        %v586 = vld [vmem:[#allocation2 + $0x194] sm:$0xf]
        %v587 = vld [vmem:[#allocation2 + $0x198] sm:$0xff]
        %v588 = vld [vmem:[#allocation2 + $0x1a0] sm:$0xf]
        %v589 = vld [vmem:[#allocation2 + $0x1a4] sm:$0xff]
        %v590 = vld [vmem:[#allocation2 + $0x1ac] sm:$0xf]
        %v591 = vld [vmem:[#allocation2 + $0x1b0] sm:$0xff]
        %v592 = vld [vmem:[#allocation2 + $0x1b8] sm:$0xf]
        %v593 = vld [vmem:[#allocation2 + $0x1bc] sm:$0xff]
        %v594 = vld [vmem:[#allocation2 + $0x1c4] sm:$0xf]
        %v595 = vld [vmem:[#allocation2 + $0x1c8] sm:$0xff]
        %v596 = vld [vmem:[#allocation2 + $0x1d0] sm:$0xf]
        %v597 = vld [vmem:[#allocation2 + $0x1d4] sm:$0xff]
        %v598 = vld [vmem:[#allocation2 + $0x1dc] sm:$0xf]
        %v599 = vld [vmem:[#allocation2 + $0x1e0] sm:$0xff]
        %v600 = vld [vmem:[#allocation2 + $0x1e8] sm:$0xf]
        %v601 = vld [vmem:[#allocation2 + $0x1ec] sm:$0xff]
        %v602 = vld [vmem:[#allocation2 + $0x1f4] sm:$0xf]
        %v603 = vld [vmem:[#allocation2 + $0x1f8] sm:$0xff]
        %v604 = vld [vmem:[#allocation2 + $0x200] sm:$0xf]
        %v605 = vld [vmem:[#allocation2 + $0x204] sm:$0xff]
        %v606 = vld [vmem:[#allocation2 + $0x20c] sm:$0xf]
        %v607 = vld [vmem:[#allocation2 + $0x210] sm:$0xff]
        %v608 = vld [vmem:[#allocation2 + $0x218] sm:$0xf]
        %v609 = vld [vmem:[#allocation2 + $0x21c] sm:$0xff]
        %v610 = vld [vmem:[#allocation2 + $0x224] sm:$0xf]
        %v611 = vld [vmem:[#allocation2 + $0x228] sm:$0xff]
        %v612 = vld [vmem:[#allocation2 + $0x230] sm:$0xf]
        %v613 = vld [vmem:[#allocation2 + $0x234] sm:$0xff]
        %v614 = vld [vmem:[#allocation2 + $0x23c] sm:$0xf]
        %v615 = vld [vmem:[#allocation8] sm:$0xff]
        %v616 = vld [vmem:[#allocation8 + $0x8] sm:$0xf]
        %v617 = vld [vmem:[#allocation8 + $0xc] sm:$0xff]
        %v618 = vld [vmem:[#allocation8 + $0x14] sm:$0xf]
        %v619 = vld [vmem:[#allocation8 + $0x18] sm:$0xff]
        %v620 = vld [vmem:[#allocation8 + $0x20] sm:$0xf]
        %v621 = vld [vmem:[#allocation8 + $0x24] sm:$0xff]
        %v622 = vld [vmem:[#allocation8 + $0x2c] sm:$0xf]
        %v623 = vld [vmem:[#allocation8 + $0x30] sm:$0xff]
        %v624 = vld [vmem:[#allocation8 + $0x38] sm:$0xf]
        %v625 = vld [vmem:[#allocation8 + $0x3c] sm:$0xff]
        %v626 = vld [vmem:[#allocation8 + $0x44] sm:$0xf]
        %v627 = vld [vmem:[#allocation8 + $0x48] sm:$0xff]
        %v628 = vld [vmem:[#allocation8 + $0x50] sm:$0xf]
        %v629 = vld [vmem:[#allocation8 + $0x54] sm:$0xff]
        %v630 = vld [vmem:[#allocation8 + $0x5c] sm:$0xf]
        %v631 = vld [vmem:[#allocation8 + $0x60] sm:$0xff]
        %v632 = vld [vmem:[#allocation8 + $0x68] sm:$0xf]
        %v633 = vld [vmem:[#allocation8 + $0x6c] sm:$0xff]
        %v634 = vld [vmem:[#allocation8 + $0x74] sm:$0xf]
        %v635 = vld [vmem:[#allocation8 + $0x78] sm:$0xff]
        %v636 = vld [vmem:[#allocation8 + $0x80] sm:$0xf]
        %v637 = vld [vmem:[#allocation8 + $0x84] sm:$0xff]
        %v638 = vld [vmem:[#allocation8 + $0x8c] sm:$0xf]
        %v639 = vld [vmem:[#allocation8 + $0x90] sm:$0xff]
        %v640 = vld [vmem:[#allocation8 + $0x98] sm:$0xf]
        %v641 = vld [vmem:[#allocation8 + $0x9c] sm:$0xff]
        %v642 = vld [vmem:[#allocation8 + $0xa4] sm:$0xf]
        %v643 = vld [vmem:[#allocation8 + $0xa8] sm:$0xff]
        %v644 = vld [vmem:[#allocation8 + $0xb0] sm:$0xf]
        %v645 = vld [vmem:[#allocation8 + $0xb4] sm:$0xff]
        %v646 = vld [vmem:[#allocation8 + $0xbc] sm:$0xf]
        %v647 = vld [vmem:[#allocation8 + $0xc0] sm:$0xff]
        %v648 = vld [vmem:[#allocation8 + $0xc8] sm:$0xf]
        %v649 = vld [vmem:[#allocation8 + $0xcc] sm:$0xff]
        %v650 = vld [vmem:[#allocation8 + $0xd4] sm:$0xf]
        %v651 = vld [vmem:[#allocation8 + $0xd8] sm:$0xff]
        %v652 = vld [vmem:[#allocation8 + $0xe0] sm:$0xf]
        %v653 = vld [vmem:[#allocation8 + $0xe4] sm:$0xff]
        %v654 = vld [vmem:[#allocation8 + $0xec] sm:$0xf]
        %v655 = vld [vmem:[#allocation8 + $0xf0] sm:$0xff]
        %v656 = vld [vmem:[#allocation8 + $0xf8] sm:$0xf]
        %v657 = vld [vmem:[#allocation8 + $0xfc] sm:$0xff]
        %v658 = vld [vmem:[#allocation8 + $0x104] sm:$0xf]
        %v659 = vld [vmem:[#allocation8 + $0x108] sm:$0xff]
        %v660 = vld [vmem:[#allocation8 + $0x110] sm:$0xf]
        %v661 = vld [vmem:[#allocation8 + $0x114] sm:$0xff]
        %v662 = vld [vmem:[#allocation8 + $0x11c] sm:$0xf]
        %v663 = vld [vmem:[#allocation8 + $0x120] sm:$0xff]
        %v664 = vld [vmem:[#allocation8 + $0x128] sm:$0xf]
        %v665 = vld [vmem:[#allocation8 + $0x12c] sm:$0xff]
        %v666 = vld [vmem:[#allocation8 + $0x134] sm:$0xf]
        %v667 = vld [vmem:[#allocation8 + $0x138] sm:$0xff]
        %v668 = vld [vmem:[#allocation8 + $0x140] sm:$0xf]
        %v669 = vld [vmem:[#allocation8 + $0x144] sm:$0xff]
        %v670 = vld [vmem:[#allocation8 + $0x14c] sm:$0xf]
        %v671 = vld [vmem:[#allocation8 + $0x150] sm:$0xff]
        %v672 = vld [vmem:[#allocation8 + $0x158] sm:$0xf]
        %v673 = vld [vmem:[#allocation8 + $0x15c] sm:$0xff]
        %v674 = vld [vmem:[#allocation8 + $0x164] sm:$0xf]
        %v675 = vld [vmem:[#allocation8 + $0x168] sm:$0xff]
        %v676 = vld [vmem:[#allocation8 + $0x170] sm:$0xf]
        %v677 = vld [vmem:[#allocation8 + $0x174] sm:$0xff]
        %v678 = vld [vmem:[#allocation8 + $0x17c] sm:$0xf]
        %v679 = vld [vmem:[#allocation8 + $0x180] sm:$0xff]
        %v680 = vld [vmem:[#allocation8 + $0x188] sm:$0xf]
        %v681 = vld [vmem:[#allocation8 + $0x18c] sm:$0xff]
        %v682 = vld [vmem:[#allocation8 + $0x194] sm:$0xf]
        %v683 = vld [vmem:[#allocation8 + $0x198] sm:$0xff]
        %v684 = vld [vmem:[#allocation8 + $0x1a0] sm:$0xf]
        %v685 = vld [vmem:[#allocation8 + $0x1a4] sm:$0xff]
        %v686 = vld [vmem:[#allocation8 + $0x1ac] sm:$0xf]
        %v687 = vld [vmem:[#allocation8 + $0x1b0] sm:$0xff]
        %v688 = vld [vmem:[#allocation8 + $0x1b8] sm:$0xf]
        %v689 = vld [vmem:[#allocation8 + $0x1bc] sm:$0xff]
        %v690 = vld [vmem:[#allocation8 + $0x1c4] sm:$0xf]
        %v691 = vld [vmem:[#allocation8 + $0x1c8] sm:$0xff]
        %v692 = vld [vmem:[#allocation8 + $0x1d0] sm:$0xf]
        %v693 = vld [vmem:[#allocation8 + $0x1d4] sm:$0xff]
        %v694 = vld [vmem:[#allocation8 + $0x1dc] sm:$0xf]
        %v695 = vld [vmem:[#allocation8 + $0x1e0] sm:$0xff]
        %v696 = vld [vmem:[#allocation8 + $0x1e8] sm:$0xf]
        %v697 = vld [vmem:[#allocation8 + $0x1ec] sm:$0xff]
        %v698 = vld [vmem:[#allocation8 + $0x1f4] sm:$0xf]
        %v699 = vld [vmem:[#allocation8 + $0x1f8] sm:$0xff]
        %v700 = vld [vmem:[#allocation8 + $0x200] sm:$0xf]
        %v701 = vld [vmem:[#allocation8 + $0x204] sm:$0xff]
        %v702 = vld [vmem:[#allocation8 + $0x20c] sm:$0xf]
        %v703 = vld [vmem:[#allocation8 + $0x210] sm:$0xff]
        %v704 = vld [vmem:[#allocation8 + $0x218] sm:$0xf]
        %v705 = vld [vmem:[#allocation8 + $0x21c] sm:$0xff]
        %v706 = vld [vmem:[#allocation8 + $0x224] sm:$0xf]
        %v707 = vld [vmem:[#allocation8 + $0x228] sm:$0xff]
        %v708 = vld [vmem:[#allocation8 + $0x230] sm:$0xf]
        %v709 = vld [vmem:[#allocation8 + $0x234] sm:$0xff]
        %v710 = vld [vmem:[#allocation8 + $0x23c] sm:$0xf]
        %v807 = vunpack.c.l.b16 %v519
        %v808 = vunpack.c.h.b16 %v519
        %v809 = vunpack.c.l.b16 %v520
        %v810 = vunpack.c.l.b16 %v521
        %v811 = vunpack.c.h.b16 %v521
        %v812 = vunpack.c.l.b16 %v522
        %v813 = vunpack.c.l.b16 %v523
        %v814 = vunpack.c.h.b16 %v523
        %v815 = vunpack.c.l.b16 %v524
        %v816 = vunpack.c.l.b16 %v525
        %v817 = vunpack.c.h.b16 %v525
        %v818 = vunpack.c.l.b16 %v526
        %v819 = vunpack.c.l.b16 %v527
        %v820 = vunpack.c.h.b16 %v527
        %v821 = vunpack.c.l.b16 %v528
        %v822 = vunpack.c.l.b16 %v529
        %v823 = vunpack.c.h.b16 %v529
        %v824 = vunpack.c.l.b16 %v530
        %v825 = vunpack.c.l.b16 %v531
        %v826 = vunpack.c.h.b16 %v531
        %v827 = vunpack.c.l.b16 %v532
        %v828 = vunpack.c.l.b16 %v533
        %v829 = vunpack.c.h.b16 %v533
        %v830 = vunpack.c.l.b16 %v534
        %v831 = vunpack.c.l.b16 %v535
        %v832 = vunpack.c.h.b16 %v535
        %v833 = vunpack.c.l.b16 %v536
        %v834 = vunpack.c.l.b16 %v537
        %v835 = vunpack.c.h.b16 %v537
        %v836 = vunpack.c.l.b16 %v538
        %v837 = vunpack.c.l.b16 %v539
        %v838 = vunpack.c.h.b16 %v539
        %v839 = vunpack.c.l.b16 %v540
        %v840 = vunpack.c.l.b16 %v541
        %v841 = vunpack.c.h.b16 %v541
        %v842 = vunpack.c.l.b16 %v542
        %v843 = vunpack.c.l.b16 %v543
        %v844 = vunpack.c.h.b16 %v543
        %v845 = vunpack.c.l.b16 %v544
        %v846 = vunpack.c.l.b16 %v545
        %v847 = vunpack.c.h.b16 %v545
        %v848 = vunpack.c.l.b16 %v546
        %v849 = vunpack.c.l.b16 %v547
        %v850 = vunpack.c.h.b16 %v547
        %v851 = vunpack.c.l.b16 %v548
        %v852 = vunpack.c.l.b16 %v549
        %v853 = vunpack.c.h.b16 %v549
        %v854 = vunpack.c.l.b16 %v550
        %v855 = vunpack.c.l.b16 %v551
        %v856 = vunpack.c.h.b16 %v551
        %v857 = vunpack.c.l.b16 %v552
        %v858 = vunpack.c.l.b16 %v553
        %v859 = vunpack.c.h.b16 %v553
        %v860 = vunpack.c.l.b16 %v554
        %v861 = vunpack.c.l.b16 %v555
        %v862 = vunpack.c.h.b16 %v555
        %v863 = vunpack.c.l.b16 %v556
        %v864 = vunpack.c.l.b16 %v557
        %v865 = vunpack.c.h.b16 %v557
        %v866 = vunpack.c.l.b16 %v558
        %v867 = vunpack.c.l.b16 %v559
        %v868 = vunpack.c.h.b16 %v559
        %v869 = vunpack.c.l.b16 %v560
        %v870 = vunpack.c.l.b16 %v561
        %v871 = vunpack.c.h.b16 %v561
        %v872 = vunpack.c.l.b16 %v562
        %v873 = vunpack.c.l.b16 %v563
        %v874 = vunpack.c.h.b16 %v563
        %v875 = vunpack.c.l.b16 %v564
        %v876 = vunpack.c.l.b16 %v565
        %v877 = vunpack.c.h.b16 %v565
        %v878 = vunpack.c.l.b16 %v566
        %v879 = vunpack.c.l.b16 %v567
        %v880 = vunpack.c.h.b16 %v567
        %v881 = vunpack.c.l.b16 %v568
        %v882 = vunpack.c.l.b16 %v569
        %v883 = vunpack.c.h.b16 %v569
        %v884 = vunpack.c.l.b16 %v570
        %v885 = vunpack.c.l.b16 %v571
        %v886 = vunpack.c.h.b16 %v571
        %v887 = vunpack.c.l.b16 %v572
        %v888 = vunpack.c.l.b16 %v573
        %v889 = vunpack.c.h.b16 %v573
        %v890 = vunpack.c.l.b16 %v574
        %v891 = vunpack.c.l.b16 %v575
        %v892 = vunpack.c.h.b16 %v575
        %v893 = vunpack.c.l.b16 %v576
        %v894 = vunpack.c.l.b16 %v577
        %v895 = vunpack.c.h.b16 %v577
        %v896 = vunpack.c.l.b16 %v578
        %v897 = vunpack.c.l.b16 %v579
        %v898 = vunpack.c.h.b16 %v579
        %v899 = vunpack.c.l.b16 %v580
        %v900 = vunpack.c.l.b16 %v581
        %v901 = vunpack.c.h.b16 %v581
        %v902 = vunpack.c.l.b16 %v582
        %v903 = vunpack.c.l.b16 %v583
        %v904 = vunpack.c.h.b16 %v583
        %v905 = vunpack.c.l.b16 %v584
        %v906 = vunpack.c.l.b16 %v585
        %v907 = vunpack.c.h.b16 %v585
        %v908 = vunpack.c.l.b16 %v586
        %v909 = vunpack.c.l.b16 %v587
        %v910 = vunpack.c.h.b16 %v587
        %v911 = vunpack.c.l.b16 %v588
        %v912 = vunpack.c.l.b16 %v589
        %v913 = vunpack.c.h.b16 %v589
        %v914 = vunpack.c.l.b16 %v590
        %v915 = vunpack.c.l.b16 %v591
        %v916 = vunpack.c.h.b16 %v591
        %v917 = vunpack.c.l.b16 %v592
        %v918 = vunpack.c.l.b16 %v593
        %v919 = vunpack.c.h.b16 %v593
        %v920 = vunpack.c.l.b16 %v594
        %v921 = vunpack.c.l.b16 %v595
        %v922 = vunpack.c.h.b16 %v595
        %v923 = vunpack.c.l.b16 %v596
        %v924 = vunpack.c.l.b16 %v597
        %v925 = vunpack.c.h.b16 %v597
        %v926 = vunpack.c.l.b16 %v598
        %v927 = vunpack.c.l.b16 %v599
        %v928 = vunpack.c.h.b16 %v599
        %v929 = vunpack.c.l.b16 %v600
        %v930 = vunpack.c.l.b16 %v601
        %v931 = vunpack.c.h.b16 %v601
        %v932 = vunpack.c.l.b16 %v602
        %v933 = vunpack.c.l.b16 %v603
        %v934 = vunpack.c.h.b16 %v603
        %v935 = vunpack.c.l.b16 %v604
        %v936 = vunpack.c.l.b16 %v605
        %v937 = vunpack.c.h.b16 %v605
        %v938 = vunpack.c.l.b16 %v606
        %v939 = vunpack.c.l.b16 %v607
        %v940 = vunpack.c.h.b16 %v607
        %v941 = vunpack.c.l.b16 %v608
        %v942 = vunpack.c.l.b16 %v609
        %v943 = vunpack.c.h.b16 %v609
        %v944 = vunpack.c.l.b16 %v610
        %v945 = vunpack.c.l.b16 %v611
        %v946 = vunpack.c.h.b16 %v611
        %v947 = vunpack.c.l.b16 %v612
        %v948 = vunpack.c.l.b16 %v613
        %v949 = vunpack.c.h.b16 %v613
        %v950 = vunpack.c.l.b16 %v614
        %v951 = vpack.c.b16 %v810, %v807
        %v952 = vpack.c.b16 %v811, %v808
        %v953 = vpack.c.b16 %v812, %v809
        %v954 = vpack.c.b16 %v816, %v813
        %v955 = vpack.c.b16 %v817, %v814
        %v956 = vpack.c.b16 %v818, %v815
        %v957 = vpack.c.b16 %v822, %v819
        %v958 = vpack.c.b16 %v823, %v820
        %v959 = vpack.c.b16 %v824, %v821
        %v960 = vpack.c.b16 %v828, %v825
        %v961 = vpack.c.b16 %v829, %v826
        %v962 = vpack.c.b16 %v830, %v827
        %v963 = vpack.c.b16 %v834, %v831
        %v964 = vpack.c.b16 %v835, %v832
        %v965 = vpack.c.b16 %v836, %v833
        %v966 = vpack.c.b16 %v840, %v837
        %v967 = vpack.c.b16 %v841, %v838
        %v968 = vpack.c.b16 %v842, %v839
        %v969 = vpack.c.b16 %v846, %v843
        %v970 = vpack.c.b16 %v847, %v844
        %v971 = vpack.c.b16 %v848, %v845
        %v972 = vpack.c.b16 %v852, %v849
        %v973 = vpack.c.b16 %v853, %v850
        %v974 = vpack.c.b16 %v854, %v851
        %v975 = vpack.c.b16 %v858, %v855
        %v976 = vpack.c.b16 %v859, %v856
        %v977 = vpack.c.b16 %v860, %v857
        %v978 = vpack.c.b16 %v864, %v861
        %v979 = vpack.c.b16 %v865, %v862
        %v980 = vpack.c.b16 %v866, %v863
        %v981 = vpack.c.b16 %v870, %v867
        %v982 = vpack.c.b16 %v871, %v868
        %v983 = vpack.c.b16 %v872, %v869
        %v984 = vpack.c.b16 %v876, %v873
        %v985 = vpack.c.b16 %v877, %v874
        %v986 = vpack.c.b16 %v878, %v875
        %v987 = vpack.c.b16 %v882, %v879
        %v988 = vpack.c.b16 %v883, %v880
        %v989 = vpack.c.b16 %v884, %v881
        %v990 = vpack.c.b16 %v888, %v885
        %v991 = vpack.c.b16 %v889, %v886
        %v992 = vpack.c.b16 %v890, %v887
        %v993 = vpack.c.b16 %v894, %v891
        %v994 = vpack.c.b16 %v895, %v892
        %v995 = vpack.c.b16 %v896, %v893
        %v996 = vpack.c.b16 %v900, %v897
        %v997 = vpack.c.b16 %v901, %v898
        %v998 = vpack.c.b16 %v902, %v899
        %v999 = vpack.c.b16 %v906, %v903
        %v1000 = vpack.c.b16 %v907, %v904
        %v1001 = vpack.c.b16 %v908, %v905
        %v1002 = vpack.c.b16 %v912, %v909
        %v1003 = vpack.c.b16 %v913, %v910
        %v1004 = vpack.c.b16 %v914, %v911
        %v1005 = vpack.c.b16 %v918, %v915
        %v1006 = vpack.c.b16 %v919, %v916
        %v1007 = vpack.c.b16 %v920, %v917
        %v1008 = vpack.c.b16 %v924, %v921
        %v1009 = vpack.c.b16 %v925, %v922
        %v1010 = vpack.c.b16 %v926, %v923
        %v1011 = vpack.c.b16 %v930, %v927
        %v1012 = vpack.c.b16 %v931, %v928
        %v1013 = vpack.c.b16 %v932, %v929
        %v1014 = vpack.c.b16 %v936, %v933
        %v1015 = vpack.c.b16 %v937, %v934
        %v1016 = vpack.c.b16 %v938, %v935
        %v1017 = vpack.c.b16 %v942, %v939
        %v1018 = vpack.c.b16 %v943, %v940
        %v1019 = vpack.c.b16 %v944, %v941
        %v1020 = vpack.c.b16 %v948, %v945
        %v1021 = vpack.c.b16 %v949, %v946
        %v1022 = vpack.c.b16 %v950, %v947
        %v1191 = vunpack.c.l.b16 %v615
        %v1192 = vunpack.c.h.b16 %v615
        %v1193 = vunpack.c.l.b16 %v616
        %v1194 = vunpack.c.l.b16 %v617
        %v1195 = vunpack.c.h.b16 %v617
        %v1196 = vunpack.c.l.b16 %v618
        %v1197 = vunpack.c.l.b16 %v619
        %v1198 = vunpack.c.h.b16 %v619
        %v1199 = vunpack.c.l.b16 %v620
        %v1200 = vunpack.c.l.b16 %v621
        %v1201 = vunpack.c.h.b16 %v621
        %v1202 = vunpack.c.l.b16 %v622
        %v1203 = vunpack.c.l.b16 %v623
        %v1204 = vunpack.c.h.b16 %v623
        %v1205 = vunpack.c.l.b16 %v624
        %v1206 = vunpack.c.l.b16 %v625
        %v1207 = vunpack.c.h.b16 %v625
        %v1208 = vunpack.c.l.b16 %v626
        %v1209 = vunpack.c.l.b16 %v627
        %v1210 = vunpack.c.h.b16 %v627
        %v1211 = vunpack.c.l.b16 %v628
        %v1212 = vunpack.c.l.b16 %v629
        %v1213 = vunpack.c.h.b16 %v629
        %v1214 = vunpack.c.l.b16 %v630
        %v1215 = vunpack.c.l.b16 %v631
        %v1216 = vunpack.c.h.b16 %v631
        %v1217 = vunpack.c.l.b16 %v632
        %v1218 = vunpack.c.l.b16 %v633
        %v1219 = vunpack.c.h.b16 %v633
        %v1220 = vunpack.c.l.b16 %v634
        %v1221 = vunpack.c.l.b16 %v635
        %v1222 = vunpack.c.h.b16 %v635
        %v1223 = vunpack.c.l.b16 %v636
        %v1224 = vunpack.c.l.b16 %v637
        %v1225 = vunpack.c.h.b16 %v637
        %v1226 = vunpack.c.l.b16 %v638
        %v1227 = vunpack.c.l.b16 %v639
        %v1228 = vunpack.c.h.b16 %v639
        %v1229 = vunpack.c.l.b16 %v640
        %v1230 = vunpack.c.l.b16 %v641
        %v1231 = vunpack.c.h.b16 %v641
        %v1232 = vunpack.c.l.b16 %v642
        %v1233 = vunpack.c.l.b16 %v643
        %v1234 = vunpack.c.h.b16 %v643
        %v1235 = vunpack.c.l.b16 %v644
        %v1236 = vunpack.c.l.b16 %v645
        %v1237 = vunpack.c.h.b16 %v645
        %v1238 = vunpack.c.l.b16 %v646
        %v1239 = vunpack.c.l.b16 %v647
        %v1240 = vunpack.c.h.b16 %v647
        %v1241 = vunpack.c.l.b16 %v648
        %v1242 = vunpack.c.l.b16 %v649
        %v1243 = vunpack.c.h.b16 %v649
        %v1244 = vunpack.c.l.b16 %v650
        %v1245 = vunpack.c.l.b16 %v651
        %v1246 = vunpack.c.h.b16 %v651
        %v1247 = vunpack.c.l.b16 %v652
        %v1248 = vunpack.c.l.b16 %v653
        %v1249 = vunpack.c.h.b16 %v653
        %v1250 = vunpack.c.l.b16 %v654
        %v1251 = vunpack.c.l.b16 %v655
        %v1252 = vunpack.c.h.b16 %v655
        %v1253 = vunpack.c.l.b16 %v656
        %v1254 = vunpack.c.l.b16 %v657
        %v1255 = vunpack.c.h.b16 %v657
        %v1256 = vunpack.c.l.b16 %v658
        %v1257 = vunpack.c.l.b16 %v659
        %v1258 = vunpack.c.h.b16 %v659
        %v1259 = vunpack.c.l.b16 %v660
        %v1260 = vunpack.c.l.b16 %v661
        %v1261 = vunpack.c.h.b16 %v661
        %v1262 = vunpack.c.l.b16 %v662
        %v1263 = vunpack.c.l.b16 %v663
        %v1264 = vunpack.c.h.b16 %v663
        %v1265 = vunpack.c.l.b16 %v664
        %v1266 = vunpack.c.l.b16 %v665
        %v1267 = vunpack.c.h.b16 %v665
        %v1268 = vunpack.c.l.b16 %v666
        %v1269 = vunpack.c.l.b16 %v667
        %v1270 = vunpack.c.h.b16 %v667
        %v1271 = vunpack.c.l.b16 %v668
        %v1272 = vunpack.c.l.b16 %v669
        %v1273 = vunpack.c.h.b16 %v669
        %v1274 = vunpack.c.l.b16 %v670
        %v1275 = vunpack.c.l.b16 %v671
        %v1276 = vunpack.c.h.b16 %v671
        %v1277 = vunpack.c.l.b16 %v672
        %v1278 = vunpack.c.l.b16 %v673
        %v1279 = vunpack.c.h.b16 %v673
        %v1280 = vunpack.c.l.b16 %v674
        %v1281 = vunpack.c.l.b16 %v675
        %v1282 = vunpack.c.h.b16 %v675
        %v1283 = vunpack.c.l.b16 %v676
        %v1284 = vunpack.c.l.b16 %v677
        %v1285 = vunpack.c.h.b16 %v677
        %v1286 = vunpack.c.l.b16 %v678
        %v1287 = vunpack.c.l.b16 %v679
        %v1288 = vunpack.c.h.b16 %v679
        %v1289 = vunpack.c.l.b16 %v680
        %v1290 = vunpack.c.l.b16 %v681
        %v1291 = vunpack.c.h.b16 %v681
        %v1292 = vunpack.c.l.b16 %v682
        %v1293 = vunpack.c.l.b16 %v683
        %v1294 = vunpack.c.h.b16 %v683
        %v1295 = vunpack.c.l.b16 %v684
        %v1296 = vunpack.c.l.b16 %v685
        %v1297 = vunpack.c.h.b16 %v685
        %v1298 = vunpack.c.l.b16 %v686
        %v1299 = vunpack.c.l.b16 %v687
        %v1300 = vunpack.c.h.b16 %v687
        %v1301 = vunpack.c.l.b16 %v688
        %v1302 = vunpack.c.l.b16 %v689
        %v1303 = vunpack.c.h.b16 %v689
        %v1304 = vunpack.c.l.b16 %v690
        %v1305 = vunpack.c.l.b16 %v691
        %v1306 = vunpack.c.h.b16 %v691
        %v1307 = vunpack.c.l.b16 %v692
        %v1308 = vunpack.c.l.b16 %v693
        %v1309 = vunpack.c.h.b16 %v693
        %v1310 = vunpack.c.l.b16 %v694
        %v1311 = vunpack.c.l.b16 %v695
        %v1312 = vunpack.c.h.b16 %v695
        %v1313 = vunpack.c.l.b16 %v696
        %v1314 = vunpack.c.l.b16 %v697
        %v1315 = vunpack.c.h.b16 %v697
        %v1316 = vunpack.c.l.b16 %v698
        %v1317 = vunpack.c.l.b16 %v699
        %v1318 = vunpack.c.h.b16 %v699
        %v1319 = vunpack.c.l.b16 %v700
        %v1320 = vunpack.c.l.b16 %v701
        %v1321 = vunpack.c.h.b16 %v701
        %v1322 = vunpack.c.l.b16 %v702
        %v1323 = vunpack.c.l.b16 %v703
        %v1324 = vunpack.c.h.b16 %v703
        %v1325 = vunpack.c.l.b16 %v704
        %v1326 = vunpack.c.l.b16 %v705
        %v1327 = vunpack.c.h.b16 %v705
        %v1328 = vunpack.c.l.b16 %v706
        %v1329 = vunpack.c.l.b16 %v707
        %v1330 = vunpack.c.h.b16 %v707
        %v1331 = vunpack.c.l.b16 %v708
        %v1332 = vunpack.c.l.b16 %v709
        %v1333 = vunpack.c.h.b16 %v709
        %v1334 = vunpack.c.l.b16 %v710
        %v1335 = vpack.c.b16 %v1194, %v1191
        %v1336 = vpack.c.b16 %v1195, %v1192
        %v1337 = vpack.c.b16 %v1196, %v1193
        %v1338 = vpack.c.b16 %v1200, %v1197
        %v1339 = vpack.c.b16 %v1201, %v1198
        %v1340 = vpack.c.b16 %v1202, %v1199
        %v1341 = vpack.c.b16 %v1206, %v1203
        %v1342 = vpack.c.b16 %v1207, %v1204
        %v1343 = vpack.c.b16 %v1208, %v1205
        %v1344 = vpack.c.b16 %v1212, %v1209
        %v1345 = vpack.c.b16 %v1213, %v1210
        %v1346 = vpack.c.b16 %v1214, %v1211
        %v1347 = vpack.c.b16 %v1218, %v1215
        %v1348 = vpack.c.b16 %v1219, %v1216
        %v1349 = vpack.c.b16 %v1220, %v1217
        %v1350 = vpack.c.b16 %v1224, %v1221
        %v1351 = vpack.c.b16 %v1225, %v1222
        %v1352 = vpack.c.b16 %v1226, %v1223
        %v1353 = vpack.c.b16 %v1230, %v1227
        %v1354 = vpack.c.b16 %v1231, %v1228
        %v1355 = vpack.c.b16 %v1232, %v1229
        %v1356 = vpack.c.b16 %v1236, %v1233
        %v1357 = vpack.c.b16 %v1237, %v1234
        %v1358 = vpack.c.b16 %v1238, %v1235
        %v1359 = vpack.c.b16 %v1242, %v1239
        %v1360 = vpack.c.b16 %v1243, %v1240
        %v1361 = vpack.c.b16 %v1244, %v1241
        %v1362 = vpack.c.b16 %v1248, %v1245
        %v1363 = vpack.c.b16 %v1249, %v1246
        %v1364 = vpack.c.b16 %v1250, %v1247
        %v1365 = vpack.c.b16 %v1254, %v1251
        %v1366 = vpack.c.b16 %v1255, %v1252
        %v1367 = vpack.c.b16 %v1256, %v1253
        %v1368 = vpack.c.b16 %v1260, %v1257
        %v1369 = vpack.c.b16 %v1261, %v1258
        %v1370 = vpack.c.b16 %v1262, %v1259
        %v1371 = vpack.c.b16 %v1266, %v1263
        %v1372 = vpack.c.b16 %v1267, %v1264
        %v1373 = vpack.c.b16 %v1268, %v1265
        %v1374 = vpack.c.b16 %v1272, %v1269
        %v1375 = vpack.c.b16 %v1273, %v1270
        %v1376 = vpack.c.b16 %v1274, %v1271
        %v1377 = vpack.c.b16 %v1278, %v1275
        %v1378 = vpack.c.b16 %v1279, %v1276
        %v1379 = vpack.c.b16 %v1280, %v1277
        %v1380 = vpack.c.b16 %v1284, %v1281
        %v1381 = vpack.c.b16 %v1285, %v1282
        %v1382 = vpack.c.b16 %v1286, %v1283
        %v1383 = vpack.c.b16 %v1290, %v1287
        %v1384 = vpack.c.b16 %v1291, %v1288
        %v1385 = vpack.c.b16 %v1292, %v1289
        %v1386 = vpack.c.b16 %v1296, %v1293
        %v1387 = vpack.c.b16 %v1297, %v1294
        %v1388 = vpack.c.b16 %v1298, %v1295
        %v1389 = vpack.c.b16 %v1302, %v1299
        %v1390 = vpack.c.b16 %v1303, %v1300
        %v1391 = vpack.c.b16 %v1304, %v1301
        %v1392 = vpack.c.b16 %v1308, %v1305
        %v1393 = vpack.c.b16 %v1309, %v1306
        %v1394 = vpack.c.b16 %v1310, %v1307
        %v1395 = vpack.c.b16 %v1314, %v1311
        %v1396 = vpack.c.b16 %v1315, %v1312
        %v1397 = vpack.c.b16 %v1316, %v1313
        %v1398 = vpack.c.b16 %v1320, %v1317
        %v1399 = vpack.c.b16 %v1321, %v1318
        %v1400 = vpack.c.b16 %v1322, %v1319
        %v1401 = vpack.c.b16 %v1326, %v1323
        %v1402 = vpack.c.b16 %v1327, %v1324
        %v1403 = vpack.c.b16 %v1328, %v1325
        %v1404 = vpack.c.b16 %v1332, %v1329
        %v1405 = vpack.c.b16 %v1333, %v1330
        %v1406 = vpack.c.b16 %v1334, %v1331
        %1479 = vmatprep.subr.bf16.mxu0 %v1357
        %1480 = vmatpush1.bf16.msra.mxu0 %v1356
        %1481 = vmatprep.subr.bf16.mxu0 %v1354
        %1482 = vmatpush1.bf16.msra.mxu0 %v1353
        %1483 = vmatprep.subr.bf16.mxu0 %v1351
        %1484 = vmatpush1.bf16.msra.mxu0 %v1350
        %1485 = vmatprep.subr.bf16.mxu0 %v1348
        %1486 = vmatpush1.bf16.msra.mxu0 %v1347
        %1487 = vmatprep.subr.bf16.mxu0 %v1345
        %1488 = vmatpush1.bf16.msra.mxu0 %v1344
        %1489 = vmatprep.subr.bf16.mxu0 %v1342
        %1490 = vmatpush1.bf16.msra.mxu0 %v1341
        %1491 = vmatprep.subr.bf16.mxu0 %v1339
        %1492 = vmatpush1.bf16.msra.mxu0 %v1338
        %1493 = vmatprep.subr.bf16.mxu0 %v1336
        %1494 = vmatpush1.bf16.msra.mxu0 %v1335
        %1495 = vmatprep.subr.bf16.mxu0 %v1381
        %1496 = vmatpush2.bf16.msra.mxu0 %v1380
        %1497 = vmatprep.subr.bf16.mxu0 %v1378
        %1498 = vmatpush2.bf16.msra.mxu0 %v1377
        %1499 = vmatprep.subr.bf16.mxu0 %v1375
        %1500 = vmatpush2.bf16.msra.mxu0 %v1374
        %1501 = vmatprep.subr.bf16.mxu0 %v1372
        %1502 = vmatpush2.bf16.msra.mxu0 %v1371
        %1503 = vmatprep.subr.bf16.mxu0 %v1369
        %1504 = vmatpush2.bf16.msra.mxu0 %v1368
        %1505 = vmatprep.subr.bf16.mxu0 %v1366
        %1506 = vmatpush2.bf16.msra.mxu0 %v1365
        %1507 = vmatprep.subr.bf16.mxu0 %v1363
        %1508 = vmatpush2.bf16.msra.mxu0 %v1362
        %1509 = vmatprep.subr.bf16.mxu0 %v1360
        %1510 = vmatpush2.bf16.msra.mxu0 %v1359
        %1511 = vmatprep.mubr.bf16.mxu0 %v952
        %1512 = vmatmul.mubr.bf16.gmra.mxu0 %v951
        %v1513 = vpop.f32.mrf.mxu0
        %v1514 = vadd.f32 0.0, %v1513
        %v1515 = vpop.f32.mrf.mxu0
        %v1516 = vadd.f32 0.0, %v1515
        %v1517 = vpop.f32.mrf.mxu0
        %v1518 = vadd.f32 0.0, %v1517
        %v1519 = vpop.f32.mrf.mxu0
        %v1520 = vadd.f32 0.0, %v1519
        %1521 = vmatprep.mubr.bf16.mxu0 %v955
        %1522 = vmatmul.mubr.bf16.gmra.mxu0 %v954
        %v1523 = vpop.f32.mrf.mxu0
        %v1524 = vpop.f32.mrf.mxu0
        %v1525 = vadd.f32 0.0, %v1524
        %v1526 = vpop.f32.mrf.mxu0
        %v1527 = vadd.f32 0.0, %v1526
        %v1528 = vpop.f32.mrf.mxu0
        %v1529 = vadd.f32 0.0, %v1528
        %1530 = vmatprep.mubr.bf16.mxu0 %v958
        %1531 = vmatmul.mubr.bf16.gmra.mxu0 %v957
        %v1532 = vpop.f32.mrf.mxu0
        %v1533 = vadd.f32 0.0, %v1532
        %v1534 = vpop.f32.mrf.mxu0
        %v1535 = vadd.f32 0.0, %v1534
        %v1536 = vpop.f32.mrf.mxu0
        %v1537 = vpop.f32.mrf.mxu0
        %v1538 = vadd.f32 0.0, %v1537
        %1539 = vmatprep.mubr.bf16.mxu0 %v961
        %1540 = vmatmul.mubr.bf16.gmra.mxu0 %v960
        %v1541 = vpop.f32.mrf.mxu0
        %v1542 = vadd.f32 0.0, %v1541
        %v1543 = vpop.f32.mrf.mxu0
        %v1544 = vadd.f32 0.0, %v1543
        %v1545 = vpop.f32.mrf.mxu0
        %v1546 = vadd.f32 0.0, %v1545
        %v1547 = vpop.f32.mrf.mxu0
        %v1548 = vadd.f32 0.0, %v1547
        %1549 = vmatprep.mubr.bf16.mxu0 %v964
        %1550 = vmatmul.mubr.bf16.gmra.mxu0 %v963
        %v1551 = vpop.f32.mrf.mxu0
        %v1552 = vpop.f32.mrf.mxu0
        %v1553 = vadd.f32 0.0, %v1552
        %v1554 = vpop.f32.mrf.mxu0
        %v1555 = vadd.f32 0.0, %v1554
        %v1556 = vpop.f32.mrf.mxu0
        %v1557 = vadd.f32 0.0, %v1556
        %1558 = vmatprep.mubr.bf16.mxu0 %v967
        %1559 = vmatmul.mubr.bf16.gmra.mxu0 %v966
        %v1560 = vpop.f32.mrf.mxu0
        %v1561 = vadd.f32 0.0, %v1560
        %v1562 = vpop.f32.mrf.mxu0
        %v1563 = vadd.f32 0.0, %v1562
        %v1564 = vpop.f32.mrf.mxu0
        %v1565 = vpop.f32.mrf.mxu0
        %v1566 = vadd.f32 0.0, %v1565
        %1567 = vmatprep.mubr.bf16.mxu0 %v970
        %1568 = vmatmul.mubr.bf16.gmra.mxu0 %v969
        %v1569 = vpop.f32.mrf.mxu0
        %v1570 = vadd.f32 0.0, %v1569
        %v1571 = vpop.f32.mrf.mxu0
        %v1572 = vadd.f32 0.0, %v1571
        %v1573 = vpop.f32.mrf.mxu0
        %v1574 = vadd.f32 0.0, %v1573
        %v1575 = vpop.f32.mrf.mxu0
        %v1576 = vadd.f32 0.0, %v1575
        %1577 = vmatprep.mubr.bf16.mxu0 %v973
        %1578 = vmatmul.mubr.bf16.gmra.mxu0 %v972
        %v1579 = vpop.f32.mrf.mxu0
        %v1580 = vpop.f32.mrf.mxu0
        %v1581 = vadd.f32 0.0, %v1580
        %v1582 = vpop.f32.mrf.mxu0
        %v1583 = vadd.f32 0.0, %v1582
        %v1584 = vpop.f32.mrf.mxu0
        %v1585 = vadd.f32 0.0, %v1584
        %1586 = vmatprep.mubr.bf16.mxu0 %v976
        %1587 = vmatmul.mubr.bf16.gmra.mxu0 %v975
        %v1588 = vpop.f32.mrf.mxu0
        %v1589 = vadd.f32 0.0, %v1588
        %v1590 = vpop.f32.mrf.mxu0
        %v1591 = vadd.f32 0.0, %v1590
        %v1592 = vpop.f32.mrf.mxu0
        %v1593 = vpop.f32.mrf.mxu0
        %v1594 = vadd.f32 0.0, %v1593
        %1595 = vmatprep.mubr.bf16.mxu0 %v979
        %1596 = vmatmul.mubr.bf16.gmra.mxu0 %v978
        %v1597 = vpop.f32.mrf.mxu0
        %v1598 = vadd.f32 0.0, %v1597
        %v1599 = vpop.f32.mrf.mxu0
        %v1600 = vadd.f32 0.0, %v1599
        %v1601 = vpop.f32.mrf.mxu0
        %v1602 = vadd.f32 0.0, %v1601
        %v1603 = vpop.f32.mrf.mxu0
        %v1604 = vadd.f32 0.0, %v1603
        %1605 = vmatprep.mubr.bf16.mxu0 %v982
        %1606 = vmatmul.mubr.bf16.gmra.mxu0 %v981
        %v1607 = vpop.f32.mrf.mxu0
        %v1608 = vpop.f32.mrf.mxu0
        %v1609 = vadd.f32 0.0, %v1608
        %v1610 = vpop.f32.mrf.mxu0
        %v1611 = vadd.f32 0.0, %v1610
        %v1612 = vpop.f32.mrf.mxu0
        %v1613 = vadd.f32 0.0, %v1612
        %1614 = vmatprep.mubr.bf16.mxu0 %v985
        %1615 = vmatmul.mubr.bf16.gmra.mxu0 %v984
        %v1616 = vpop.f32.mrf.mxu0
        %v1617 = vadd.f32 0.0, %v1616
        %v1618 = vpop.f32.mrf.mxu0
        %v1619 = vadd.f32 0.0, %v1618
        %v1620 = vpop.f32.mrf.mxu0
        %v1621 = vpop.f32.mrf.mxu0
        %v1622 = vadd.f32 0.0, %v1621
        %1623 = vmatprep.mubr.bf16.mxu0 %v988
        %1624 = vmatmul.mubr.bf16.gmra.mxu0 %v987
        %v1625 = vpop.f32.mrf.mxu0
        %v1626 = vadd.f32 0.0, %v1625
        %v1627 = vpop.f32.mrf.mxu0
        %v1628 = vadd.f32 0.0, %v1627
        %v1629 = vpop.f32.mrf.mxu0
        %v1630 = vadd.f32 0.0, %v1629
        %v1631 = vpop.f32.mrf.mxu0
        %v1632 = vadd.f32 0.0, %v1631
        %1633 = vmatprep.mubr.bf16.mxu0 %v991
        %1634 = vmatmul.mubr.bf16.gmra.mxu0 %v990
        %v1635 = vpop.f32.mrf.mxu0
        %v1636 = vpop.f32.mrf.mxu0
        %v1637 = vadd.f32 0.0, %v1636
        %v1638 = vpop.f32.mrf.mxu0
        %v1639 = vadd.f32 0.0, %v1638
        %v1640 = vpop.f32.mrf.mxu0
        %v1641 = vadd.f32 0.0, %v1640
        %1642 = vmatprep.mubr.bf16.mxu0 %v994
        %1643 = vmatmul.mubr.bf16.gmra.mxu0 %v993
        %v1644 = vpop.f32.mrf.mxu0
        %v1645 = vadd.f32 0.0, %v1644
        %v1646 = vpop.f32.mrf.mxu0
        %v1647 = vadd.f32 0.0, %v1646
        %v1648 = vpop.f32.mrf.mxu0
        %v1649 = vpop.f32.mrf.mxu0
        %v1650 = vadd.f32 0.0, %v1649
        %1651 = vmatprep.mubr.bf16.mxu0 %v997
        %1652 = vmatmul.mubr.bf16.gmra.mxu0 %v996
        %v1653 = vpop.f32.mrf.mxu0
        %v1654 = vadd.f32 0.0, %v1653
        %v1655 = vpop.f32.mrf.mxu0
        %v1656 = vadd.f32 0.0, %v1655
        %v1657 = vpop.f32.mrf.mxu0
        %v1658 = vadd.f32 0.0, %v1657
        %v1659 = vpop.f32.mrf.mxu0
        %v1660 = vadd.f32 0.0, %v1659
        %1661 = vmatprep.mubr.bf16.mxu0 %v1000
        %1662 = vmatmul.mubr.bf16.gmra.mxu0 %v999
        %v1663 = vpop.f32.mrf.mxu0
        %v1664 = vpop.f32.mrf.mxu0
        %v1665 = vadd.f32 0.0, %v1664
        %v1666 = vpop.f32.mrf.mxu0
        %v1667 = vadd.f32 0.0, %v1666
        %v1668 = vpop.f32.mrf.mxu0
        %v1669 = vadd.f32 0.0, %v1668
        %1670 = vmatprep.mubr.bf16.mxu0 %v1003
        %1671 = vmatmul.mubr.bf16.gmra.mxu0 %v1002
        %v1672 = vpop.f32.mrf.mxu0
        %v1673 = vadd.f32 0.0, %v1672
        %v1674 = vpop.f32.mrf.mxu0
        %v1675 = vadd.f32 0.0, %v1674
        %v1676 = vpop.f32.mrf.mxu0
        %v1677 = vpop.f32.mrf.mxu0
        %v1678 = vadd.f32 0.0, %v1677
        %1679 = vmatprep.mubr.bf16.mxu0 %v1006
        %1680 = vmatmul.mubr.bf16.gmra.mxu0 %v1005
        %v1681 = vpop.f32.mrf.mxu0
        %v1682 = vadd.f32 0.0, %v1681
        %v1683 = vpop.f32.mrf.mxu0
        %v1684 = vadd.f32 0.0, %v1683
        %v1685 = vpop.f32.mrf.mxu0
        %v1686 = vadd.f32 0.0, %v1685
        %v1687 = vpop.f32.mrf.mxu0
        %v1688 = vadd.f32 0.0, %v1687
        %1689 = vmatprep.mubr.bf16.mxu0 %v1009
        %1690 = vmatmul.mubr.bf16.gmra.mxu0 %v1008
        %v1691 = vpop.f32.mrf.mxu0
        %v1692 = vpop.f32.mrf.mxu0
        %v1693 = vadd.f32 0.0, %v1692
        %v1694 = vpop.f32.mrf.mxu0
        %v1695 = vadd.f32 0.0, %v1694
        %v1696 = vpop.f32.mrf.mxu0
        %v1697 = vadd.f32 0.0, %v1696
        %1698 = vmatprep.mubr.bf16.mxu0 %v1012
        %1699 = vmatmul.mubr.bf16.gmra.mxu0 %v1011
        %v1700 = vpop.f32.mrf.mxu0
        %v1701 = vadd.f32 0.0, %v1700
        %v1702 = vpop.f32.mrf.mxu0
        %v1703 = vadd.f32 0.0, %v1702
        %v1704 = vpop.f32.mrf.mxu0
        %v1705 = vpop.f32.mrf.mxu0
        %v1706 = vadd.f32 0.0, %v1705
        %1707 = vmatprep.mubr.bf16.mxu0 %v1015
        %1708 = vmatmul.mubr.bf16.gmra.mxu0 %v1014
        %v1709 = vpop.f32.mrf.mxu0
        %v1710 = vadd.f32 0.0, %v1709
        %v1711 = vpop.f32.mrf.mxu0
        %v1712 = vadd.f32 0.0, %v1711
        %v1713 = vpop.f32.mrf.mxu0
        %v1714 = vadd.f32 0.0, %v1713
        %v1715 = vpop.f32.mrf.mxu0
        %v1716 = vadd.f32 0.0, %v1715
        %1717 = vmatprep.mubr.bf16.mxu0 %v1018
        %1718 = vmatmul.mubr.bf16.gmra.mxu0 %v1017
        %v1719 = vpop.f32.mrf.mxu0
        %v1720 = vpop.f32.mrf.mxu0
        %v1721 = vadd.f32 0.0, %v1720
        %v1722 = vpop.f32.mrf.mxu0
        %v1723 = vadd.f32 0.0, %v1722
        %v1724 = vpop.f32.mrf.mxu0
        %v1725 = vadd.f32 0.0, %v1724
        %1726 = vmatprep.mubr.bf16.mxu0 %v1021
        %1727 = vmatmul.mubr.bf16.gmra.mxu0 %v1020
        %v1728 = vpop.f32.mrf.mxu0
        %v1729 = vadd.f32 0.0, %v1728
        %v1730 = vpop.f32.mrf.mxu0
        %v1731 = vadd.f32 0.0, %v1730
        %v1732 = vpop.f32.mrf.mxu0
        %v1733 = vpop.f32.mrf.mxu0
        %v1734 = vadd.f32 0.0, %v1733
        %1735 = vdwg.mxu0
        %1736 = vmatprep.subr.bf16.mxu0 %v1405
        %1737 = vmatpush1.bf16.msra.mxu0 %v1404
        %1738 = vmatprep.subr.bf16.mxu0 %v1402
        %1739 = vmatpush1.bf16.msra.mxu0 %v1401
        %1740 = vmatprep.subr.bf16.mxu0 %v1399
        %1741 = vmatpush1.bf16.msra.mxu0 %v1398
        %1742 = vmatprep.subr.bf16.mxu0 %v1396
        %1743 = vmatpush1.bf16.msra.mxu0 %v1395
        %1744 = vmatprep.subr.bf16.mxu0 %v1393
        %1745 = vmatpush1.bf16.msra.mxu0 %v1392
        %1746 = vmatprep.subr.bf16.mxu0 %v1390
        %1747 = vmatpush1.bf16.msra.mxu0 %v1389
        %1748 = vmatprep.subr.bf16.mxu0 %v1387
        %1749 = vmatpush1.bf16.msra.mxu0 %v1386
        %1750 = vmatprep.subr.bf16.mxu0 %v1384
        %1751 = vmatpush1.bf16.msra.mxu0 %v1383
        %1752 = vmatprep.subr.bf16.mxu0 0
        %1753 = vmatpush2.bf16.msra.mxu0 0
        %1754 = vmatprep.subr.bf16.mxu0 0
        %1755 = vmatpush2.bf16.msra.mxu0 0
        %1756 = vmatprep.subr.bf16.mxu0 0
        %1757 = vmatpush2.bf16.msra.mxu0 0
        %1758 = vmatprep.subr.bf16.mxu0 0
        %1759 = vmatpush2.bf16.msra.mxu0 0
        %1760 = vmatprep.subr.bf16.mxu0 0
        %1761 = vmatpush2.bf16.msra.mxu0 0
        %1762 = vmatprep.subr.bf16.mxu0 0
        %1763 = vmatpush2.bf16.msra.mxu0 0
        %1764 = vmatprep.subr.bf16.mxu0 0
        %1765 = vmatpush2.bf16.msra.mxu0 0
        %1766 = vmatprep.subr.bf16.mxu0 0
        %1767 = vmatpush2.bf16.msra.mxu0 0
        %1768 = vmatprep.mubr.bf16.mxu0 0
        %1769 = vmatmul.mubr.bf16.gmra.mxu0 %v953
        %v1770 = vpop.f32.mrf.mxu0
        %v1771 = vadd.f32 %v1514, %v1770
        %v1772 = vpop.f32.mrf.mxu0
        %v1773 = vadd.f32 %v1516, %v1772
        %v1774 = vpop.f32.mrf.mxu0
        %v1775 = vadd.f32 %v1518, %v1774
        %v1776 = vpop.f32.mrf.mxu0
        %v1777 = vadd.f32 %v1520, %v1776
        %1778 = vmatprep.mubr.bf16.mxu0 0
        %1779 = vmatmul.mubr.bf16.gmra.mxu0 %v956
        %v1780 = vpop.f32.mrf.mxu0
        %v1781 = vpop.f32.mrf.mxu0
        %v1782 = vadd.f32 %v1525, %v1781
        %v1783 = vpop.f32.mrf.mxu0
        %v1784 = vadd.f32 %v1527, %v1783
        %v1785 = vpop.f32.mrf.mxu0
        %v1786 = vadd.f32 %v1529, %v1785
        %1787 = vmatprep.mubr.bf16.mxu0 0
        %1788 = vmatmul.mubr.bf16.gmra.mxu0 %v959
        %v1789 = vpop.f32.mrf.mxu0
        %v1790 = vadd.f32 %v1533, %v1789
        %v1791 = vpop.f32.mrf.mxu0
        %v1792 = vadd.f32 %v1535, %v1791
        %v1793 = vpop.f32.mrf.mxu0
        %v1794 = vpop.f32.mrf.mxu0
        %v1795 = vadd.f32 %v1538, %v1794
        %1796 = vmatprep.mubr.bf16.mxu0 0
        %1797 = vmatmul.mubr.bf16.gmra.mxu0 %v962
        %v1798 = vpop.f32.mrf.mxu0
        %v1799 = vadd.f32 %v1542, %v1798
        %v1800 = vpop.f32.mrf.mxu0
        %v1801 = vadd.f32 %v1544, %v1800
        %v1802 = vpop.f32.mrf.mxu0
        %v1803 = vadd.f32 %v1546, %v1802
        %v1804 = vpop.f32.mrf.mxu0
        %v1805 = vadd.f32 %v1548, %v1804
        %1806 = vmatprep.mubr.bf16.mxu0 0
        %1807 = vmatmul.mubr.bf16.gmra.mxu0 %v965
        %v1808 = vpop.f32.mrf.mxu0
        %v1809 = vpop.f32.mrf.mxu0
        %v1810 = vadd.f32 %v1553, %v1809
        %v1811 = vpop.f32.mrf.mxu0
        %v1812 = vadd.f32 %v1555, %v1811
        %v1813 = vpop.f32.mrf.mxu0
        %v1814 = vadd.f32 %v1557, %v1813
        %1815 = vmatprep.mubr.bf16.mxu0 0
        %1816 = vmatmul.mubr.bf16.gmra.mxu0 %v968
        %v1817 = vpop.f32.mrf.mxu0
        %v1818 = vadd.f32 %v1561, %v1817
        %v1819 = vpop.f32.mrf.mxu0
        %v1820 = vadd.f32 %v1563, %v1819
        %v1821 = vpop.f32.mrf.mxu0
        %v1822 = vpop.f32.mrf.mxu0
        %v1823 = vadd.f32 %v1566, %v1822
        %1824 = vmatprep.mubr.bf16.mxu0 0
        %1825 = vmatmul.mubr.bf16.gmra.mxu0 %v971
        %v1826 = vpop.f32.mrf.mxu0
        %v1827 = vadd.f32 %v1570, %v1826
        %v1828 = vpop.f32.mrf.mxu0
        %v1829 = vadd.f32 %v1572, %v1828
        %v1830 = vpop.f32.mrf.mxu0
        %v1831 = vadd.f32 %v1574, %v1830
        %v1832 = vpop.f32.mrf.mxu0
        %v1833 = vadd.f32 %v1576, %v1832
        %1834 = vmatprep.mubr.bf16.mxu0 0
        %1835 = vmatmul.mubr.bf16.gmra.mxu0 %v974
        %v1836 = vpop.f32.mrf.mxu0
        %v1837 = vpop.f32.mrf.mxu0
        %v1838 = vadd.f32 %v1581, %v1837
        %v1839 = vpop.f32.mrf.mxu0
        %v1840 = vadd.f32 %v1583, %v1839
        %v1841 = vpop.f32.mrf.mxu0
        %v1842 = vadd.f32 %v1585, %v1841
        %1843 = vmatprep.mubr.bf16.mxu0 0
        %1844 = vmatmul.mubr.bf16.gmra.mxu0 %v977
        %v1845 = vpop.f32.mrf.mxu0
        %v1846 = vadd.f32 %v1589, %v1845
        %v1847 = vpop.f32.mrf.mxu0
        %v1848 = vadd.f32 %v1591, %v1847
        %v1849 = vpop.f32.mrf.mxu0
        %v1850 = vpop.f32.mrf.mxu0
        %v1851 = vadd.f32 %v1594, %v1850
        %1852 = vmatprep.mubr.bf16.mxu0 0
        %1853 = vmatmul.mubr.bf16.gmra.mxu0 %v980
        %v1854 = vpop.f32.mrf.mxu0
        %v1855 = vadd.f32 %v1598, %v1854
        %v1856 = vpop.f32.mrf.mxu0
        %v1857 = vadd.f32 %v1600, %v1856
        %v1858 = vpop.f32.mrf.mxu0
        %v1859 = vadd.f32 %v1602, %v1858
        %v1860 = vpop.f32.mrf.mxu0
        %v1861 = vadd.f32 %v1604, %v1860
        %1862 = vmatprep.mubr.bf16.mxu0 0
        %1863 = vmatmul.mubr.bf16.gmra.mxu0 %v983
        %v1864 = vpop.f32.mrf.mxu0
        %v1865 = vpop.f32.mrf.mxu0
        %v1866 = vadd.f32 %v1609, %v1865
        %v1867 = vpop.f32.mrf.mxu0
        %v1868 = vadd.f32 %v1611, %v1867
        %v1869 = vpop.f32.mrf.mxu0
        %v1870 = vadd.f32 %v1613, %v1869
        %1871 = vmatprep.mubr.bf16.mxu0 0
        %1872 = vmatmul.mubr.bf16.gmra.mxu0 %v986
        %v1873 = vpop.f32.mrf.mxu0
        %v1874 = vadd.f32 %v1617, %v1873
        %v1875 = vpop.f32.mrf.mxu0
        %v1876 = vadd.f32 %v1619, %v1875
        %v1877 = vpop.f32.mrf.mxu0
        %v1878 = vpop.f32.mrf.mxu0
        %v1879 = vadd.f32 %v1622, %v1878
        %1880 = vmatprep.mubr.bf16.mxu0 0
        %1881 = vmatmul.mubr.bf16.gmra.mxu0 %v989
        %v1882 = vpop.f32.mrf.mxu0
        %v1883 = vadd.f32 %v1626, %v1882
        %v1884 = vpop.f32.mrf.mxu0
        %v1885 = vadd.f32 %v1628, %v1884
        %v1886 = vpop.f32.mrf.mxu0
        %v1887 = vadd.f32 %v1630, %v1886
        %v1888 = vpop.f32.mrf.mxu0
        %v1889 = vadd.f32 %v1632, %v1888
        %1890 = vmatprep.mubr.bf16.mxu0 0
        %1891 = vmatmul.mubr.bf16.gmra.mxu0 %v992
        %v1892 = vpop.f32.mrf.mxu0
        %v1893 = vpop.f32.mrf.mxu0
        %v1894 = vadd.f32 %v1637, %v1893
        %v1895 = vpop.f32.mrf.mxu0
        %v1896 = vadd.f32 %v1639, %v1895
        %v1897 = vpop.f32.mrf.mxu0
        %v1898 = vadd.f32 %v1641, %v1897
        %1899 = vmatprep.mubr.bf16.mxu0 0
        %1900 = vmatmul.mubr.bf16.gmra.mxu0 %v995
        %v1901 = vpop.f32.mrf.mxu0
        %v1902 = vadd.f32 %v1645, %v1901
        %v1903 = vpop.f32.mrf.mxu0
        %v1904 = vadd.f32 %v1647, %v1903
        %v1905 = vpop.f32.mrf.mxu0
        %v1906 = vpop.f32.mrf.mxu0
        %v1907 = vadd.f32 %v1650, %v1906
        %1908 = vmatprep.mubr.bf16.mxu0 0
        %1909 = vmatmul.mubr.bf16.gmra.mxu0 %v998
        %v1910 = vpop.f32.mrf.mxu0
        %v1911 = vadd.f32 %v1654, %v1910
        %v1912 = vpop.f32.mrf.mxu0
        %v1913 = vadd.f32 %v1656, %v1912
        %v1914 = vpop.f32.mrf.mxu0
        %v1915 = vadd.f32 %v1658, %v1914
        %v1916 = vpop.f32.mrf.mxu0
        %v1917 = vadd.f32 %v1660, %v1916
        %1918 = vmatprep.mubr.bf16.mxu0 0
        %1919 = vmatmul.mubr.bf16.gmra.mxu0 %v1001
        %v1920 = vpop.f32.mrf.mxu0
        %v1921 = vpop.f32.mrf.mxu0
        %v1922 = vadd.f32 %v1665, %v1921
        %v1923 = vpop.f32.mrf.mxu0
        %v1924 = vadd.f32 %v1667, %v1923
        %v1925 = vpop.f32.mrf.mxu0
        %v1926 = vadd.f32 %v1669, %v1925
        %1927 = vmatprep.mubr.bf16.mxu0 0
        %1928 = vmatmul.mubr.bf16.gmra.mxu0 %v1004
        %v1929 = vpop.f32.mrf.mxu0
        %v1930 = vadd.f32 %v1673, %v1929
        %v1931 = vpop.f32.mrf.mxu0
        %v1932 = vadd.f32 %v1675, %v1931
        %v1933 = vpop.f32.mrf.mxu0
        %v1934 = vpop.f32.mrf.mxu0
        %v1935 = vadd.f32 %v1678, %v1934
        %1936 = vmatprep.mubr.bf16.mxu0 0
        %1937 = vmatmul.mubr.bf16.gmra.mxu0 %v1007
        %v1938 = vpop.f32.mrf.mxu0
        %v1939 = vadd.f32 %v1682, %v1938
        %v1940 = vpop.f32.mrf.mxu0
        %v1941 = vadd.f32 %v1684, %v1940
        %v1942 = vpop.f32.mrf.mxu0
        %v1943 = vadd.f32 %v1686, %v1942
        %v1944 = vpop.f32.mrf.mxu0
        %v1945 = vadd.f32 %v1688, %v1944
        %1946 = vmatprep.mubr.bf16.mxu0 0
        %1947 = vmatmul.mubr.bf16.gmra.mxu0 %v1010
        %v1948 = vpop.f32.mrf.mxu0
        %v1949 = vpop.f32.mrf.mxu0
        %v1950 = vadd.f32 %v1693, %v1949
        %v1951 = vpop.f32.mrf.mxu0
        %v1952 = vadd.f32 %v1695, %v1951
        %v1953 = vpop.f32.mrf.mxu0
        %v1954 = vadd.f32 %v1697, %v1953
        %1955 = vmatprep.mubr.bf16.mxu0 0
        %1956 = vmatmul.mubr.bf16.gmra.mxu0 %v1013
        %v1957 = vpop.f32.mrf.mxu0
        %v1958 = vadd.f32 %v1701, %v1957
        %v1959 = vpop.f32.mrf.mxu0
        %v1960 = vadd.f32 %v1703, %v1959
        %v1961 = vpop.f32.mrf.mxu0
        %v1962 = vpop.f32.mrf.mxu0
        %v1963 = vadd.f32 %v1706, %v1962
        %1964 = vmatprep.mubr.bf16.mxu0 0
        %1965 = vmatmul.mubr.bf16.gmra.mxu0 %v1016
        %v1966 = vpop.f32.mrf.mxu0
        %v1967 = vadd.f32 %v1710, %v1966
        %v1968 = vpop.f32.mrf.mxu0
        %v1969 = vadd.f32 %v1712, %v1968
        %v1970 = vpop.f32.mrf.mxu0
        %v1971 = vadd.f32 %v1714, %v1970
        %v1972 = vpop.f32.mrf.mxu0
        %v1973 = vadd.f32 %v1716, %v1972
        %1974 = vmatprep.mubr.bf16.mxu0 0
        %1975 = vmatmul.mubr.bf16.gmra.mxu0 %v1019
        %v1976 = vpop.f32.mrf.mxu0
        %v1977 = vpop.f32.mrf.mxu0
        %v1978 = vadd.f32 %v1721, %v1977
        %v1979 = vpop.f32.mrf.mxu0
        %v1980 = vadd.f32 %v1723, %v1979
        %v1981 = vpop.f32.mrf.mxu0
        %v1982 = vadd.f32 %v1725, %v1981
        %1983 = vmatprep.mubr.bf16.mxu0 0
        %1984 = vmatmul.mubr.bf16.gmra.mxu0 %v1022
        %v1985 = vpop.f32.mrf.mxu0
        %v1986 = vadd.f32 %v1729, %v1985
        %v1987 = vpop.f32.mrf.mxu0
        %v1988 = vadd.f32 %v1731, %v1987
        %v1989 = vpop.f32.mrf.mxu0
        %v1990 = vpop.f32.mrf.mxu0
        %v1991 = vadd.f32 %v1734, %v1990
        %1992 = vdwg.mxu0
        %1993 = vmatprep.subr.bf16.mxu0 0
        %1994 = vmatpush1.bf16.msra.mxu0 %v1358
        %1995 = vmatprep.subr.bf16.mxu0 0
        %1996 = vmatpush1.bf16.msra.mxu0 %v1355
        %1997 = vmatprep.subr.bf16.mxu0 0
        %1998 = vmatpush1.bf16.msra.mxu0 %v1352
        %1999 = vmatprep.subr.bf16.mxu0 0
        %2000 = vmatpush1.bf16.msra.mxu0 %v1349
        %2001 = vmatprep.subr.bf16.mxu0 0
        %2002 = vmatpush1.bf16.msra.mxu0 %v1346
        %2003 = vmatprep.subr.bf16.mxu0 0
        %2004 = vmatpush1.bf16.msra.mxu0 %v1343
        %2005 = vmatprep.subr.bf16.mxu0 0
        %2006 = vmatpush1.bf16.msra.mxu0 %v1340
        %2007 = vmatprep.subr.bf16.mxu0 0
        %2008 = vmatpush1.bf16.msra.mxu0 %v1337
        %2009 = vmatprep.subr.bf16.mxu0 0
        %2010 = vmatpush2.bf16.msra.mxu0 %v1382
        %2011 = vmatprep.subr.bf16.mxu0 0
        %2012 = vmatpush2.bf16.msra.mxu0 %v1379
        %2013 = vmatprep.subr.bf16.mxu0 0
        %2014 = vmatpush2.bf16.msra.mxu0 %v1376
        %2015 = vmatprep.subr.bf16.mxu0 0
        %2016 = vmatpush2.bf16.msra.mxu0 %v1373
        %2017 = vmatprep.subr.bf16.mxu0 0
        %2018 = vmatpush2.bf16.msra.mxu0 %v1370
        %2019 = vmatprep.subr.bf16.mxu0 0
        %2020 = vmatpush2.bf16.msra.mxu0 %v1367
        %2021 = vmatprep.subr.bf16.mxu0 0
        %2022 = vmatpush2.bf16.msra.mxu0 %v1364
        %2023 = vmatprep.subr.bf16.mxu0 0
        %2024 = vmatpush2.bf16.msra.mxu0 %v1361
        %2025 = vmatprep.mubr.bf16.mxu0 %v952
        %2026 = vmatmul.mubr.bf16.gmra.mxu0 %v951
        %v2027 = vpop.f32.mrf.mxu0
        %v2028 = vadd.f32 0.0, %v2027
        %v2029 = vpop.f32.mrf.mxu0
        %v2030 = vpop.f32.mrf.mxu0
        %v2031 = vadd.f32 0.0, %v2030
        %v2032 = vpop.f32.mrf.mxu0
        %2033 = vmatprep.mubr.bf16.mxu0 %v955
        %2034 = vmatmul.mubr.bf16.gmra.mxu0 %v954
        %v2035 = vpop.f32.mrf.mxu0
        %v2036 = vadd.f32 0.0, %v2035
        %v2037 = vpop.f32.mrf.mxu0
        %v2038 = vpop.f32.mrf.mxu0
        %v2039 = vadd.f32 0.0, %v2038
        %v2040 = vpop.f32.mrf.mxu0
        %2041 = vmatprep.mubr.bf16.mxu0 %v958
        %2042 = vmatmul.mubr.bf16.gmra.mxu0 %v957
        %v2043 = vpop.f32.mrf.mxu0
        %v2044 = vadd.f32 0.0, %v2043
        %v2045 = vpop.f32.mrf.mxu0
        %v2046 = vpop.f32.mrf.mxu0
        %v2047 = vadd.f32 0.0, %v2046
        %v2048 = vpop.f32.mrf.mxu0
        %2049 = vmatprep.mubr.bf16.mxu0 %v961
        %2050 = vmatmul.mubr.bf16.gmra.mxu0 %v960
        %v2051 = vpop.f32.mrf.mxu0
        %v2052 = vadd.f32 0.0, %v2051
        %v2053 = vpop.f32.mrf.mxu0
        %v2054 = vpop.f32.mrf.mxu0
        %v2055 = vadd.f32 0.0, %v2054
        %v2056 = vpop.f32.mrf.mxu0
        %2057 = vmatprep.mubr.bf16.mxu0 %v964
        %2058 = vmatmul.mubr.bf16.gmra.mxu0 %v963
        %v2059 = vpop.f32.mrf.mxu0
        %v2060 = vadd.f32 0.0, %v2059
        %v2061 = vpop.f32.mrf.mxu0
        %v2062 = vpop.f32.mrf.mxu0
        %v2063 = vadd.f32 0.0, %v2062
        %v2064 = vpop.f32.mrf.mxu0
        %2065 = vmatprep.mubr.bf16.mxu0 %v967
        %2066 = vmatmul.mubr.bf16.gmra.mxu0 %v966
        %v2067 = vpop.f32.mrf.mxu0
        %v2068 = vadd.f32 0.0, %v2067
        %v2069 = vpop.f32.mrf.mxu0
        %v2070 = vpop.f32.mrf.mxu0
        %v2071 = vadd.f32 0.0, %v2070
        %v2072 = vpop.f32.mrf.mxu0
        %2073 = vmatprep.mubr.bf16.mxu0 %v970
        %2074 = vmatmul.mubr.bf16.gmra.mxu0 %v969
        %v2075 = vpop.f32.mrf.mxu0
        %v2076 = vadd.f32 0.0, %v2075
        %v2077 = vpop.f32.mrf.mxu0
        %v2078 = vpop.f32.mrf.mxu0
        %v2079 = vadd.f32 0.0, %v2078
        %v2080 = vpop.f32.mrf.mxu0
        %2081 = vmatprep.mubr.bf16.mxu0 %v973
        %2082 = vmatmul.mubr.bf16.gmra.mxu0 %v972
        %v2083 = vpop.f32.mrf.mxu0
        %v2084 = vadd.f32 0.0, %v2083
        %v2085 = vpop.f32.mrf.mxu0
        %v2086 = vpop.f32.mrf.mxu0
        %v2087 = vadd.f32 0.0, %v2086
        %v2088 = vpop.f32.mrf.mxu0
        %2089 = vmatprep.mubr.bf16.mxu0 %v976
        %2090 = vmatmul.mubr.bf16.gmra.mxu0 %v975
        %v2091 = vpop.f32.mrf.mxu0
        %v2092 = vadd.f32 0.0, %v2091
        %v2093 = vpop.f32.mrf.mxu0
        %v2094 = vpop.f32.mrf.mxu0
        %v2095 = vadd.f32 0.0, %v2094
        %v2096 = vpop.f32.mrf.mxu0
        %2097 = vmatprep.mubr.bf16.mxu0 %v979
        %2098 = vmatmul.mubr.bf16.gmra.mxu0 %v978
        %v2099 = vpop.f32.mrf.mxu0
        %v2100 = vadd.f32 0.0, %v2099
        %v2101 = vpop.f32.mrf.mxu0
        %v2102 = vpop.f32.mrf.mxu0
        %v2103 = vadd.f32 0.0, %v2102
        %v2104 = vpop.f32.mrf.mxu0
        %2105 = vmatprep.mubr.bf16.mxu0 %v982
        %2106 = vmatmul.mubr.bf16.gmra.mxu0 %v981
        %v2107 = vpop.f32.mrf.mxu0
        %v2108 = vadd.f32 0.0, %v2107
        %v2109 = vpop.f32.mrf.mxu0
        %v2110 = vpop.f32.mrf.mxu0
        %v2111 = vadd.f32 0.0, %v2110
        %v2112 = vpop.f32.mrf.mxu0
        %2113 = vmatprep.mubr.bf16.mxu0 %v985
        %2114 = vmatmul.mubr.bf16.gmra.mxu0 %v984
        %v2115 = vpop.f32.mrf.mxu0
        %v2116 = vadd.f32 0.0, %v2115
        %v2117 = vpop.f32.mrf.mxu0
        %v2118 = vpop.f32.mrf.mxu0
        %v2119 = vadd.f32 0.0, %v2118
        %v2120 = vpop.f32.mrf.mxu0
        %2121 = vmatprep.mubr.bf16.mxu0 %v988
        %2122 = vmatmul.mubr.bf16.gmra.mxu0 %v987
        %v2123 = vpop.f32.mrf.mxu0
        %v2124 = vadd.f32 0.0, %v2123
        %v2125 = vpop.f32.mrf.mxu0
        %v2126 = vpop.f32.mrf.mxu0
        %v2127 = vadd.f32 0.0, %v2126
        %v2128 = vpop.f32.mrf.mxu0
        %2129 = vmatprep.mubr.bf16.mxu0 %v991
        %2130 = vmatmul.mubr.bf16.gmra.mxu0 %v990
        %v2131 = vpop.f32.mrf.mxu0
        %v2132 = vadd.f32 0.0, %v2131
        %v2133 = vpop.f32.mrf.mxu0
        %v2134 = vpop.f32.mrf.mxu0
        %v2135 = vadd.f32 0.0, %v2134
        %v2136 = vpop.f32.mrf.mxu0
        %2137 = vmatprep.mubr.bf16.mxu0 %v994
        %2138 = vmatmul.mubr.bf16.gmra.mxu0 %v993
        %v2139 = vpop.f32.mrf.mxu0
        %v2140 = vadd.f32 0.0, %v2139
        %v2141 = vpop.f32.mrf.mxu0
        %v2142 = vpop.f32.mrf.mxu0
        %v2143 = vadd.f32 0.0, %v2142
        %v2144 = vpop.f32.mrf.mxu0
        %2145 = vmatprep.mubr.bf16.mxu0 %v997
        %2146 = vmatmul.mubr.bf16.gmra.mxu0 %v996
        %v2147 = vpop.f32.mrf.mxu0
        %v2148 = vadd.f32 0.0, %v2147
        %v2149 = vpop.f32.mrf.mxu0
        %v2150 = vpop.f32.mrf.mxu0
        %v2151 = vadd.f32 0.0, %v2150
        %v2152 = vpop.f32.mrf.mxu0
        %2153 = vmatprep.mubr.bf16.mxu0 %v1000
        %2154 = vmatmul.mubr.bf16.gmra.mxu0 %v999
        %v2155 = vpop.f32.mrf.mxu0
        %v2156 = vadd.f32 0.0, %v2155
        %v2157 = vpop.f32.mrf.mxu0
        %v2158 = vpop.f32.mrf.mxu0
        %v2159 = vadd.f32 0.0, %v2158
        %v2160 = vpop.f32.mrf.mxu0
        %2161 = vmatprep.mubr.bf16.mxu0 %v1003
        %2162 = vmatmul.mubr.bf16.gmra.mxu0 %v1002
        %v2163 = vpop.f32.mrf.mxu0
        %v2164 = vadd.f32 0.0, %v2163
        %v2165 = vpop.f32.mrf.mxu0
        %v2166 = vpop.f32.mrf.mxu0
        %v2167 = vadd.f32 0.0, %v2166
        %v2168 = vpop.f32.mrf.mxu0
        %2169 = vmatprep.mubr.bf16.mxu0 %v1006
        %2170 = vmatmul.mubr.bf16.gmra.mxu0 %v1005
        %v2171 = vpop.f32.mrf.mxu0
        %v2172 = vadd.f32 0.0, %v2171
        %v2173 = vpop.f32.mrf.mxu0
        %v2174 = vpop.f32.mrf.mxu0
        %v2175 = vadd.f32 0.0, %v2174
        %v2176 = vpop.f32.mrf.mxu0
        %2177 = vmatprep.mubr.bf16.mxu0 %v1009
        %2178 = vmatmul.mubr.bf16.gmra.mxu0 %v1008
        %v2179 = vpop.f32.mrf.mxu0
        %v2180 = vadd.f32 0.0, %v2179
        %v2181 = vpop.f32.mrf.mxu0
        %v2182 = vpop.f32.mrf.mxu0
        %v2183 = vadd.f32 0.0, %v2182
        %v2184 = vpop.f32.mrf.mxu0
        %2185 = vmatprep.mubr.bf16.mxu0 %v1012
        %2186 = vmatmul.mubr.bf16.gmra.mxu0 %v1011
        %v2187 = vpop.f32.mrf.mxu0
        %v2188 = vadd.f32 0.0, %v2187
        %v2189 = vpop.f32.mrf.mxu0
        %v2190 = vpop.f32.mrf.mxu0
        %v2191 = vadd.f32 0.0, %v2190
        %v2192 = vpop.f32.mrf.mxu0
        %2193 = vmatprep.mubr.bf16.mxu0 %v1015
        %2194 = vmatmul.mubr.bf16.gmra.mxu0 %v1014
        %v2195 = vpop.f32.mrf.mxu0
        %v2196 = vadd.f32 0.0, %v2195
        %v2197 = vpop.f32.mrf.mxu0
        %v2198 = vpop.f32.mrf.mxu0
        %v2199 = vadd.f32 0.0, %v2198
        %v2200 = vpop.f32.mrf.mxu0
        %2201 = vmatprep.mubr.bf16.mxu0 %v1018
        %2202 = vmatmul.mubr.bf16.gmra.mxu0 %v1017
        %v2203 = vpop.f32.mrf.mxu0
        %v2204 = vadd.f32 0.0, %v2203
        %v2205 = vpop.f32.mrf.mxu0
        %v2206 = vpop.f32.mrf.mxu0
        %v2207 = vadd.f32 0.0, %v2206
        %v2208 = vpop.f32.mrf.mxu0
        %2209 = vmatprep.mubr.bf16.mxu0 %v1021
        %2210 = vmatmul.mubr.bf16.gmra.mxu0 %v1020
        %v2211 = vpop.f32.mrf.mxu0
        %v2212 = vadd.f32 0.0, %v2211
        %v2213 = vpop.f32.mrf.mxu0
        %v2214 = vpop.f32.mrf.mxu0
        %v2215 = vadd.f32 0.0, %v2214
        %v2216 = vpop.f32.mrf.mxu0
        %2217 = vdwg.mxu0
        %2218 = vmatprep.subr.bf16.mxu0 0
        %2219 = vmatpush1.bf16.msra.mxu0 %v1406
        %2220 = vmatprep.subr.bf16.mxu0 0
        %2221 = vmatpush1.bf16.msra.mxu0 %v1403
        %2222 = vmatprep.subr.bf16.mxu0 0
        %2223 = vmatpush1.bf16.msra.mxu0 %v1400
        %2224 = vmatprep.subr.bf16.mxu0 0
        %2225 = vmatpush1.bf16.msra.mxu0 %v1397
        %2226 = vmatprep.subr.bf16.mxu0 0
        %2227 = vmatpush1.bf16.msra.mxu0 %v1394
        %2228 = vmatprep.subr.bf16.mxu0 0
        %2229 = vmatpush1.bf16.msra.mxu0 %v1391
        %2230 = vmatprep.subr.bf16.mxu0 0
        %2231 = vmatpush1.bf16.msra.mxu0 %v1388
        %2232 = vmatprep.subr.bf16.mxu0 0
        %2233 = vmatpush1.bf16.msra.mxu0 %v1385
        %2234 = vmatprep.subr.bf16.mxu0 0
        %2235 = vmatpush2.bf16.msra.mxu0 0
        %2236 = vmatprep.subr.bf16.mxu0 0
        %2237 = vmatpush2.bf16.msra.mxu0 0
        %2238 = vmatprep.subr.bf16.mxu0 0
        %2239 = vmatpush2.bf16.msra.mxu0 0
        %2240 = vmatprep.subr.bf16.mxu0 0
        %2241 = vmatpush2.bf16.msra.mxu0 0
        %2242 = vmatprep.subr.bf16.mxu0 0
        %2243 = vmatpush2.bf16.msra.mxu0 0
        %2244 = vmatprep.subr.bf16.mxu0 0
        %2245 = vmatpush2.bf16.msra.mxu0 0
        %2246 = vmatprep.subr.bf16.mxu0 0
        %2247 = vmatpush2.bf16.msra.mxu0 0
        %2248 = vmatprep.subr.bf16.mxu0 0
        %2249 = vmatpush2.bf16.msra.mxu0 0
        %2250 = vmatprep.mubr.bf16.mxu0 0
        %2251 = vmatmul.mubr.bf16.gmra.mxu0 %v953
        %v2252 = vpop.f32.mrf.mxu0
        %v2253 = vadd.f32 %v2028, %v2252
        %v2254 = vpop.f32.mrf.mxu0
        %v2255 = vpop.f32.mrf.mxu0
        %v2256 = vadd.f32 %v2031, %v2255
        %v2257 = vpop.f32.mrf.mxu0
        %2258 = vmatprep.mubr.bf16.mxu0 0
        %2259 = vmatmul.mubr.bf16.gmra.mxu0 %v956
        %v2260 = vpop.f32.mrf.mxu0
        %v2261 = vadd.f32 %v2036, %v2260
        %v2262 = vpop.f32.mrf.mxu0
        %v2263 = vpop.f32.mrf.mxu0
        %v2264 = vadd.f32 %v2039, %v2263
        %v2265 = vpop.f32.mrf.mxu0
        %2266 = vmatprep.mubr.bf16.mxu0 0
        %2267 = vmatmul.mubr.bf16.gmra.mxu0 %v959
        %v2268 = vpop.f32.mrf.mxu0
        %v2269 = vadd.f32 %v2044, %v2268
        %v2270 = vpop.f32.mrf.mxu0
        %v2271 = vpop.f32.mrf.mxu0
        %v2272 = vadd.f32 %v2047, %v2271
        %v2273 = vpop.f32.mrf.mxu0
        %2274 = vmatprep.mubr.bf16.mxu0 0
        %2275 = vmatmul.mubr.bf16.gmra.mxu0 %v962
        %v2276 = vpop.f32.mrf.mxu0
        %v2277 = vadd.f32 %v2052, %v2276
        %v2278 = vpop.f32.mrf.mxu0
        %v2279 = vpop.f32.mrf.mxu0
        %v2280 = vadd.f32 %v2055, %v2279
        %v2281 = vpop.f32.mrf.mxu0
        %2282 = vmatprep.mubr.bf16.mxu0 0
        %2283 = vmatmul.mubr.bf16.gmra.mxu0 %v965
        %v2284 = vpop.f32.mrf.mxu0
        %v2285 = vadd.f32 %v2060, %v2284
        %v2286 = vpop.f32.mrf.mxu0
        %v2287 = vpop.f32.mrf.mxu0
        %v2288 = vadd.f32 %v2063, %v2287
        %v2289 = vpop.f32.mrf.mxu0
        %2290 = vmatprep.mubr.bf16.mxu0 0
        %2291 = vmatmul.mubr.bf16.gmra.mxu0 %v968
        %v2292 = vpop.f32.mrf.mxu0
        %v2293 = vadd.f32 %v2068, %v2292
        %v2294 = vpop.f32.mrf.mxu0
        %v2295 = vpop.f32.mrf.mxu0
        %v2296 = vadd.f32 %v2071, %v2295
        %v2297 = vpop.f32.mrf.mxu0
        %2298 = vmatprep.mubr.bf16.mxu0 0
        %2299 = vmatmul.mubr.bf16.gmra.mxu0 %v971
        %v2300 = vpop.f32.mrf.mxu0
        %v2301 = vadd.f32 %v2076, %v2300
        %v2302 = vpop.f32.mrf.mxu0
        %v2303 = vpop.f32.mrf.mxu0
        %v2304 = vadd.f32 %v2079, %v2303
        %v2305 = vpop.f32.mrf.mxu0
        %2306 = vmatprep.mubr.bf16.mxu0 0
        %2307 = vmatmul.mubr.bf16.gmra.mxu0 %v974
        %v2308 = vpop.f32.mrf.mxu0
        %v2309 = vadd.f32 %v2084, %v2308
        %v2310 = vpop.f32.mrf.mxu0
        %v2311 = vpop.f32.mrf.mxu0
        %v2312 = vadd.f32 %v2087, %v2311
        %v2313 = vpop.f32.mrf.mxu0
        %2314 = vmatprep.mubr.bf16.mxu0 0
        %2315 = vmatmul.mubr.bf16.gmra.mxu0 %v977
        %v2316 = vpop.f32.mrf.mxu0
        %v2317 = vadd.f32 %v2092, %v2316
        %v2318 = vpop.f32.mrf.mxu0
        %v2319 = vpop.f32.mrf.mxu0
        %v2320 = vadd.f32 %v2095, %v2319
        %v2321 = vpop.f32.mrf.mxu0
        %2322 = vmatprep.mubr.bf16.mxu0 0
        %2323 = vmatmul.mubr.bf16.gmra.mxu0 %v980
        %v2324 = vpop.f32.mrf.mxu0
        %v2325 = vadd.f32 %v2100, %v2324
        %v2326 = vpop.f32.mrf.mxu0
        %v2327 = vpop.f32.mrf.mxu0
        %v2328 = vadd.f32 %v2103, %v2327
        %v2329 = vpop.f32.mrf.mxu0
        %2330 = vmatprep.mubr.bf16.mxu0 0
        %2331 = vmatmul.mubr.bf16.gmra.mxu0 %v983
        %v2332 = vpop.f32.mrf.mxu0
        %v2333 = vadd.f32 %v2108, %v2332
        %v2334 = vpop.f32.mrf.mxu0
        %v2335 = vpop.f32.mrf.mxu0
        %v2336 = vadd.f32 %v2111, %v2335
        %v2337 = vpop.f32.mrf.mxu0
        %2338 = vmatprep.mubr.bf16.mxu0 0
        %2339 = vmatmul.mubr.bf16.gmra.mxu0 %v986
        %v2340 = vpop.f32.mrf.mxu0
        %v2341 = vadd.f32 %v2116, %v2340
        %v2342 = vpop.f32.mrf.mxu0
        %v2343 = vpop.f32.mrf.mxu0
        %v2344 = vadd.f32 %v2119, %v2343
        %v2345 = vpop.f32.mrf.mxu0
        %2346 = vmatprep.mubr.bf16.mxu0 0
        %2347 = vmatmul.mubr.bf16.gmra.mxu0 %v989
        %v2348 = vpop.f32.mrf.mxu0
        %v2349 = vadd.f32 %v2124, %v2348
        %v2350 = vpop.f32.mrf.mxu0
        %v2351 = vpop.f32.mrf.mxu0
        %v2352 = vadd.f32 %v2127, %v2351
        %v2353 = vpop.f32.mrf.mxu0
        %2354 = vmatprep.mubr.bf16.mxu0 0
        %2355 = vmatmul.mubr.bf16.gmra.mxu0 %v992
        %v2356 = vpop.f32.mrf.mxu0
        %v2357 = vadd.f32 %v2132, %v2356
        %v2358 = vpop.f32.mrf.mxu0
        %v2359 = vpop.f32.mrf.mxu0
        %v2360 = vadd.f32 %v2135, %v2359
        %v2361 = vpop.f32.mrf.mxu0
        %2362 = vmatprep.mubr.bf16.mxu0 0
        %2363 = vmatmul.mubr.bf16.gmra.mxu0 %v995
        %v2364 = vpop.f32.mrf.mxu0
        %v2365 = vadd.f32 %v2140, %v2364
        %v2366 = vpop.f32.mrf.mxu0
        %v2367 = vpop.f32.mrf.mxu0
        %v2368 = vadd.f32 %v2143, %v2367
        %v2369 = vpop.f32.mrf.mxu0
        %2370 = vmatprep.mubr.bf16.mxu0 0
        %2371 = vmatmul.mubr.bf16.gmra.mxu0 %v998
        %v2372 = vpop.f32.mrf.mxu0
        %v2373 = vadd.f32 %v2148, %v2372
        %v2374 = vpop.f32.mrf.mxu0
        %v2375 = vpop.f32.mrf.mxu0
        %v2376 = vadd.f32 %v2151, %v2375
        %v2377 = vpop.f32.mrf.mxu0
        %2378 = vmatprep.mubr.bf16.mxu0 0
        %2379 = vmatmul.mubr.bf16.gmra.mxu0 %v1001
        %v2380 = vpop.f32.mrf.mxu0
        %v2381 = vadd.f32 %v2156, %v2380
        %v2382 = vpop.f32.mrf.mxu0
        %v2383 = vpop.f32.mrf.mxu0
        %v2384 = vadd.f32 %v2159, %v2383
        %v2385 = vpop.f32.mrf.mxu0
        %2386 = vmatprep.mubr.bf16.mxu0 0
        %2387 = vmatmul.mubr.bf16.gmra.mxu0 %v1004
        %v2388 = vpop.f32.mrf.mxu0
        %v2389 = vadd.f32 %v2164, %v2388
        %v2390 = vpop.f32.mrf.mxu0
        %v2391 = vpop.f32.mrf.mxu0
        %v2392 = vadd.f32 %v2167, %v2391
        %v2393 = vpop.f32.mrf.mxu0
        %2394 = vmatprep.mubr.bf16.mxu0 0
        %2395 = vmatmul.mubr.bf16.gmra.mxu0 %v1007
        %v2396 = vpop.f32.mrf.mxu0
        %v2397 = vadd.f32 %v2172, %v2396
        %v2398 = vpop.f32.mrf.mxu0
        %v2399 = vpop.f32.mrf.mxu0
        %v2400 = vadd.f32 %v2175, %v2399
        %v2401 = vpop.f32.mrf.mxu0
        %2402 = vmatprep.mubr.bf16.mxu0 0
        %2403 = vmatmul.mubr.bf16.gmra.mxu0 %v1010
        %v2404 = vpop.f32.mrf.mxu0
        %v2405 = vadd.f32 %v2180, %v2404
        %v2406 = vpop.f32.mrf.mxu0
        %v2407 = vpop.f32.mrf.mxu0
        %v2408 = vadd.f32 %v2183, %v2407
        %v2409 = vpop.f32.mrf.mxu0
        %2410 = vmatprep.mubr.bf16.mxu0 0
        %2411 = vmatmul.mubr.bf16.gmra.mxu0 %v1013
        %v2412 = vpop.f32.mrf.mxu0
        %v2413 = vadd.f32 %v2188, %v2412
        %v2414 = vpop.f32.mrf.mxu0
        %v2415 = vpop.f32.mrf.mxu0
        %v2416 = vadd.f32 %v2191, %v2415
        %v2417 = vpop.f32.mrf.mxu0
        %2418 = vmatprep.mubr.bf16.mxu0 0
        %2419 = vmatmul.mubr.bf16.gmra.mxu0 %v1016
        %v2420 = vpop.f32.mrf.mxu0
        %v2421 = vadd.f32 %v2196, %v2420
        %v2422 = vpop.f32.mrf.mxu0
        %v2423 = vpop.f32.mrf.mxu0
        %v2424 = vadd.f32 %v2199, %v2423
        %v2425 = vpop.f32.mrf.mxu0
        %2426 = vmatprep.mubr.bf16.mxu0 0
        %2427 = vmatmul.mubr.bf16.gmra.mxu0 %v1019
        %v2428 = vpop.f32.mrf.mxu0
        %v2429 = vadd.f32 %v2204, %v2428
        %v2430 = vpop.f32.mrf.mxu0
        %v2431 = vpop.f32.mrf.mxu0
        %v2432 = vadd.f32 %v2207, %v2431
        %v2433 = vpop.f32.mrf.mxu0
        %2434 = vmatprep.mubr.bf16.mxu0 0
        %2435 = vmatmul.mubr.bf16.gmra.mxu0 %v1022
        %v2436 = vpop.f32.mrf.mxu0
        %v2437 = vadd.f32 %v2212, %v2436
        %v2438 = vpop.f32.mrf.mxu0
        %v2439 = vpop.f32.mrf.mxu0
        %v2440 = vadd.f32 %v2215, %v2439
        %v2441 = vpop.f32.mrf.mxu0
        %2442 = vdwg.mxu0
        %vm2491 = vcmask 1046528
        %v2492 = vrot.slane %v1773, 1
        %v2493 = vrot.slane %v1777, 1
        %v2494 = vsel %vm2491, %v2492, %v2493
        %v2495 = vrot.slane %v1782, 1
        %v2496 = vsel %vm2491, %v2493, %v2495
        %v2497 = vrot.slane %v1786, 1
        %v2498 = vrot.slane %v1792, 1
        %v2499 = vsel %vm2491, %v2497, %v2498
        %v2500 = vrot.slane %v1795, 1
        %v2501 = vsel %vm2491, %v2498, %v2500
        %v2502 = vrot.slane %v1801, 1
        %v2503 = vrot.slane %v1805, 1
        %v2504 = vsel %vm2491, %v2502, %v2503
        %v2505 = vrot.slane %v1810, 1
        %v2506 = vsel %vm2491, %v2503, %v2505
        %v2507 = vrot.slane %v1814, 1
        %v2508 = vrot.slane %v1820, 1
        %v2509 = vsel %vm2491, %v2507, %v2508
        %v2510 = vrot.slane %v1823, 1
        %v2511 = vsel %vm2491, %v2508, %v2510
        %v2512 = vrot.slane %v1829, 1
        %v2513 = vrot.slane %v1833, 1
        %v2514 = vsel %vm2491, %v2512, %v2513
        %v2515 = vrot.slane %v1838, 1
        %v2516 = vsel %vm2491, %v2513, %v2515
        %v2517 = vrot.slane %v1842, 1
        %v2518 = vrot.slane %v1848, 1
        %v2519 = vsel %vm2491, %v2517, %v2518
        %v2520 = vrot.slane %v1851, 1
        %v2521 = vsel %vm2491, %v2518, %v2520
        %v2522 = vrot.slane %v1857, 1
        %v2523 = vrot.slane %v1861, 1
        %v2524 = vsel %vm2491, %v2522, %v2523
        %v2525 = vrot.slane %v1866, 1
        %v2526 = vsel %vm2491, %v2523, %v2525
        %v2527 = vrot.slane %v1870, 1
        %v2528 = vrot.slane %v1876, 1
        %v2529 = vsel %vm2491, %v2527, %v2528
        %v2530 = vrot.slane %v1879, 1
        %v2531 = vsel %vm2491, %v2528, %v2530
        %v2532 = vrot.slane %v1885, 1
        %v2533 = vrot.slane %v1889, 1
        %v2534 = vsel %vm2491, %v2532, %v2533
        %v2535 = vrot.slane %v1894, 1
        %v2536 = vsel %vm2491, %v2533, %v2535
        %v2537 = vrot.slane %v1898, 1
        %v2538 = vrot.slane %v1904, 1
        %v2539 = vsel %vm2491, %v2537, %v2538
        %v2540 = vrot.slane %v1907, 1
        %v2541 = vsel %vm2491, %v2538, %v2540
        %v2542 = vrot.slane %v1913, 1
        %v2543 = vrot.slane %v1917, 1
        %v2544 = vsel %vm2491, %v2542, %v2543
        %v2545 = vrot.slane %v1922, 1
        %v2546 = vsel %vm2491, %v2543, %v2545
        %v2547 = vrot.slane %v1926, 1
        %v2548 = vrot.slane %v1932, 1
        %v2549 = vsel %vm2491, %v2547, %v2548
        %v2550 = vrot.slane %v1935, 1
        %v2551 = vsel %vm2491, %v2548, %v2550
        %v2552 = vrot.slane %v1941, 1
        %v2553 = vrot.slane %v1945, 1
        %v2554 = vsel %vm2491, %v2552, %v2553
        %v2555 = vrot.slane %v1950, 1
        %v2556 = vsel %vm2491, %v2553, %v2555
        %v2557 = vrot.slane %v1954, 1
        %v2558 = vrot.slane %v1960, 1
        %v2559 = vsel %vm2491, %v2557, %v2558
        %v2560 = vrot.slane %v1963, 1
        %v2561 = vsel %vm2491, %v2558, %v2560
        %v2562 = vrot.slane %v1969, 1
        %v2563 = vrot.slane %v1973, 1
        %v2564 = vsel %vm2491, %v2562, %v2563
        %v2565 = vrot.slane %v1978, 1
        %v2566 = vsel %vm2491, %v2563, %v2565
        %v2567 = vrot.slane %v1982, 1
        %v2568 = vrot.slane %v1988, 1
        %v2569 = vsel %vm2491, %v2567, %v2568
        %v2570 = vrot.slane %v1991, 1
        %v2571 = vsel %vm2491, %v2568, %v2570
        %v2604 = vadd.f32 %v1771, %v2494
        %v2605 = vadd.f32 %v1775, %v2496
        %v2606 = vadd.f32 %v1784, %v2499
        %v2607 = vadd.f32 %v1790, %v2501
        %v2608 = vadd.f32 %v1799, %v2504
        %v2609 = vadd.f32 %v1803, %v2506
        %v2610 = vadd.f32 %v1812, %v2509
        %v2611 = vadd.f32 %v1818, %v2511
        %v2612 = vadd.f32 %v1827, %v2514
        %v2613 = vadd.f32 %v1831, %v2516
        %v2614 = vadd.f32 %v1840, %v2519
        %v2615 = vadd.f32 %v1846, %v2521
        %v2616 = vadd.f32 %v1855, %v2524
        %v2617 = vadd.f32 %v1859, %v2526
        %v2618 = vadd.f32 %v1868, %v2529
        %v2619 = vadd.f32 %v1874, %v2531
        %v2620 = vadd.f32 %v1883, %v2534
        %v2621 = vadd.f32 %v1887, %v2536
        %v2622 = vadd.f32 %v1896, %v2539
        %v2623 = vadd.f32 %v1902, %v2541
        %v2624 = vadd.f32 %v1911, %v2544
        %v2625 = vadd.f32 %v1915, %v2546
        %v2626 = vadd.f32 %v1924, %v2549
        %v2627 = vadd.f32 %v1930, %v2551
        %v2628 = vadd.f32 %v1939, %v2554
        %v2629 = vadd.f32 %v1943, %v2556
        %v2630 = vadd.f32 %v1952, %v2559
        %v2631 = vadd.f32 %v1958, %v2561
        %v2632 = vadd.f32 %v1967, %v2564
        %v2633 = vadd.f32 %v1971, %v2566
        %v2634 = vadd.f32 %v1980, %v2569
        %v2635 = vadd.f32 %v1986, %v2571
        %vm2684 = vcmask 1045504
        %v2685 = vrot.slane %v2253, 2
        %v2686 = vrot.slane %v2256, 2
        %v2687 = vsel %vm2684, %v2685, %v2686
        %v2688 = vrot.slane %v2261, 2
        %v2689 = vsel %vm2684, %v2686, %v2688
        %v2690 = vrot.slane %v2264, 2
        %v2691 = vrot.slane %v2269, 2
        %v2692 = vsel %vm2684, %v2690, %v2691
        %v2693 = vrot.slane %v2272, 2
        %v2694 = vsel %vm2684, %v2691, %v2693
        %v2695 = vrot.slane %v2277, 2
        %v2696 = vrot.slane %v2280, 2
        %v2697 = vsel %vm2684, %v2695, %v2696
        %v2698 = vrot.slane %v2285, 2
        %v2699 = vsel %vm2684, %v2696, %v2698
        %v2700 = vrot.slane %v2288, 2
        %v2701 = vrot.slane %v2293, 2
        %v2702 = vsel %vm2684, %v2700, %v2701
        %v2703 = vrot.slane %v2296, 2
        %v2704 = vsel %vm2684, %v2701, %v2703
        %v2705 = vrot.slane %v2301, 2
        %v2706 = vrot.slane %v2304, 2
        %v2707 = vsel %vm2684, %v2705, %v2706
        %v2708 = vrot.slane %v2309, 2
        %v2709 = vsel %vm2684, %v2706, %v2708
        %v2710 = vrot.slane %v2312, 2
        %v2711 = vrot.slane %v2317, 2
        %v2712 = vsel %vm2684, %v2710, %v2711
        %v2713 = vrot.slane %v2320, 2
        %v2714 = vsel %vm2684, %v2711, %v2713
        %v2715 = vrot.slane %v2325, 2
        %v2716 = vrot.slane %v2328, 2
        %v2717 = vsel %vm2684, %v2715, %v2716
        %v2718 = vrot.slane %v2333, 2
        %v2719 = vsel %vm2684, %v2716, %v2718
        %v2720 = vrot.slane %v2336, 2
        %v2721 = vrot.slane %v2341, 2
        %v2722 = vsel %vm2684, %v2720, %v2721
        %v2723 = vrot.slane %v2344, 2
        %v2724 = vsel %vm2684, %v2721, %v2723
        %v2725 = vrot.slane %v2349, 2
        %v2726 = vrot.slane %v2352, 2
        %v2727 = vsel %vm2684, %v2725, %v2726
        %v2728 = vrot.slane %v2357, 2
        %v2729 = vsel %vm2684, %v2726, %v2728
        %v2730 = vrot.slane %v2360, 2
        %v2731 = vrot.slane %v2365, 2
        %v2732 = vsel %vm2684, %v2730, %v2731
        %v2733 = vrot.slane %v2368, 2
        %v2734 = vsel %vm2684, %v2731, %v2733
        %v2735 = vrot.slane %v2373, 2
        %v2736 = vrot.slane %v2376, 2
        %v2737 = vsel %vm2684, %v2735, %v2736
        %v2738 = vrot.slane %v2381, 2
        %v2739 = vsel %vm2684, %v2736, %v2738
        %v2740 = vrot.slane %v2384, 2
        %v2741 = vrot.slane %v2389, 2
        %v2742 = vsel %vm2684, %v2740, %v2741
        %v2743 = vrot.slane %v2392, 2
        %v2744 = vsel %vm2684, %v2741, %v2743
        %v2745 = vrot.slane %v2397, 2
        %v2746 = vrot.slane %v2400, 2
        %v2747 = vsel %vm2684, %v2745, %v2746
        %v2748 = vrot.slane %v2405, 2
        %v2749 = vsel %vm2684, %v2746, %v2748
        %v2750 = vrot.slane %v2408, 2
        %v2751 = vrot.slane %v2413, 2
        %v2752 = vsel %vm2684, %v2750, %v2751
        %v2753 = vrot.slane %v2416, 2
        %v2754 = vsel %vm2684, %v2751, %v2753
        %v2755 = vrot.slane %v2421, 2
        %v2756 = vrot.slane %v2424, 2
        %v2757 = vsel %vm2684, %v2755, %v2756
        %v2758 = vrot.slane %v2429, 2
        %v2759 = vsel %vm2684, %v2756, %v2758
        %v2760 = vrot.slane %v2432, 2
        %v2761 = vrot.slane %v2437, 2
        %v2762 = vsel %vm2684, %v2760, %v2761
        %v2763 = vrot.slane %v2440, 2
        %v2764 = vsel %vm2684, %v2761, %v2763
        %v2797 = vadd.f32 %v2604, %v2687
        %v2798 = vadd.f32 %v2605, %v2689
        %v2799 = vadd.f32 %v2606, %v2692
        %v2800 = vadd.f32 %v2607, %v2694
        %v2801 = vadd.f32 %v2608, %v2697
        %v2802 = vadd.f32 %v2609, %v2699
        %v2803 = vadd.f32 %v2610, %v2702
        %v2804 = vadd.f32 %v2611, %v2704
        %v2805 = vadd.f32 %v2612, %v2707
        %v2806 = vadd.f32 %v2613, %v2709
        %v2807 = vadd.f32 %v2614, %v2712
        %v2808 = vadd.f32 %v2615, %v2714
        %v2809 = vadd.f32 %v2616, %v2717
        %v2810 = vadd.f32 %v2617, %v2719
        %v2811 = vadd.f32 %v2618, %v2722
        %v2812 = vadd.f32 %v2619, %v2724
        %v2813 = vadd.f32 %v2620, %v2727
        %v2814 = vadd.f32 %v2621, %v2729
        %v2815 = vadd.f32 %v2622, %v2732
        %v2816 = vadd.f32 %v2623, %v2734
        %v2817 = vadd.f32 %v2624, %v2737
        %v2818 = vadd.f32 %v2625, %v2739
        %v2819 = vadd.f32 %v2626, %v2742
        %v2820 = vadd.f32 %v2627, %v2744
        %v2821 = vadd.f32 %v2628, %v2747
        %v2822 = vadd.f32 %v2629, %v2749
        %v2823 = vadd.f32 %v2630, %v2752
        %v2824 = vadd.f32 %v2631, %v2754
        %v2825 = vadd.f32 %v2632, %v2757
        %v2826 = vadd.f32 %v2633, %v2759
        %v2827 = vadd.f32 %v2634, %v2762
        %v2828 = vadd.f32 %v2635, %v2764
        %v2829 = vld [vmem:[%s3] sm:$0x1]
        %v2831 = vlaneseq
        %v2832 = vshrl.u32 %v2831, 7
        %v2833 = vsub.s32 0, %v2832
        %v2834 = vrot.slane %v2829, %v2833
        %v2836 = vadd.f32 %v2797, %v2834
        %v2837 = vadd.f32 %v2798, %v2834
        %v2838 = vadd.f32 %v2799, %v2834
        %v2839 = vadd.f32 %v2800, %v2834
        %v2840 = vadd.f32 %v2801, %v2834
        %v2841 = vadd.f32 %v2802, %v2834
        %v2842 = vadd.f32 %v2803, %v2834
        %v2843 = vadd.f32 %v2804, %v2834
        %v2844 = vadd.f32 %v2805, %v2834
        %v2845 = vadd.f32 %v2806, %v2834
        %v2846 = vadd.f32 %v2807, %v2834
        %v2847 = vadd.f32 %v2808, %v2834
        %v2848 = vadd.f32 %v2809, %v2834
        %v2849 = vadd.f32 %v2810, %v2834
        %v2850 = vadd.f32 %v2811, %v2834
        %v2851 = vadd.f32 %v2812, %v2834
        %v2852 = vadd.f32 %v2813, %v2834
        %v2853 = vadd.f32 %v2814, %v2834
        %v2854 = vadd.f32 %v2815, %v2834
        %v2855 = vadd.f32 %v2816, %v2834
        %v2856 = vadd.f32 %v2817, %v2834
        %v2857 = vadd.f32 %v2818, %v2834
        %v2858 = vadd.f32 %v2819, %v2834
        %v2859 = vadd.f32 %v2820, %v2834
        %v2860 = vadd.f32 %v2821, %v2834
        %v2861 = vadd.f32 %v2822, %v2834
        %v2862 = vadd.f32 %v2823, %v2834
        %v2863 = vadd.f32 %v2824, %v2834
        %v2864 = vadd.f32 %v2825, %v2834
        %v2865 = vadd.f32 %v2826, %v2834
        %v2866 = vadd.f32 %v2827, %v2834
        %v2867 = vadd.f32 %v2828, %v2834
        %v2868 = vmax.f32 %v2836, 0.0
        %v2869 = vmax.f32 %v2837, 0.0
        %v2870 = vmax.f32 %v2838, 0.0
        %v2871 = vmax.f32 %v2839, 0.0
        %v2872 = vmax.f32 %v2840, 0.0
        %v2873 = vmax.f32 %v2841, 0.0
        %v2874 = vmax.f32 %v2842, 0.0
        %v2875 = vmax.f32 %v2843, 0.0
        %v2876 = vmax.f32 %v2844, 0.0
        %v2877 = vmax.f32 %v2845, 0.0
        %v2878 = vmax.f32 %v2846, 0.0
        %v2879 = vmax.f32 %v2847, 0.0
        %v2880 = vmax.f32 %v2848, 0.0
        %v2881 = vmax.f32 %v2849, 0.0
        %v2882 = vmax.f32 %v2850, 0.0
        %v2883 = vmax.f32 %v2851, 0.0
        %v2884 = vmax.f32 %v2852, 0.0
        %v2885 = vmax.f32 %v2853, 0.0
        %v2886 = vmax.f32 %v2854, 0.0
        %v2887 = vmax.f32 %v2855, 0.0
        %v2888 = vmax.f32 %v2856, 0.0
        %v2889 = vmax.f32 %v2857, 0.0
        %v2890 = vmax.f32 %v2858, 0.0
        %v2891 = vmax.f32 %v2859, 0.0
        %v2892 = vmax.f32 %v2860, 0.0
        %v2893 = vmax.f32 %v2861, 0.0
        %v2894 = vmax.f32 %v2862, 0.0
        %v2895 = vmax.f32 %v2863, 0.0
        %v2896 = vmax.f32 %v2864, 0.0
        %v2897 = vmax.f32 %v2865, 0.0
        %v2898 = vmax.f32 %v2866, 0.0
        %v2899 = vmax.f32 %v2867, 0.0
        %v2900 = vpack.c.bf16 %v2869, %v2868
        %v2901 = vpack.c.bf16 %v2871, %v2870
        %v2902 = vpack.c.bf16 %v2873, %v2872
        %v2903 = vpack.c.bf16 %v2875, %v2874
        %v2904 = vpack.c.bf16 %v2877, %v2876
        %v2905 = vpack.c.bf16 %v2879, %v2878
        %v2906 = vpack.c.bf16 %v2881, %v2880
        %v2907 = vpack.c.bf16 %v2883, %v2882
        %v2908 = vpack.c.bf16 %v2885, %v2884
        %v2909 = vpack.c.bf16 %v2887, %v2886
        %v2910 = vpack.c.bf16 %v2889, %v2888
        %v2911 = vpack.c.bf16 %v2891, %v2890
        %v2912 = vpack.c.bf16 %v2893, %v2892
        %v2913 = vpack.c.bf16 %v2895, %v2894
        %v2914 = vpack.c.bf16 %v2897, %v2896
        %v2915 = vpack.c.bf16 %v2899, %v2898
        %v2932 = vunpack.c.l.b16 %v2900
        %v2933 = vunpack.c.h.b16 %v2900
        %v2934 = vunpack.c.l.b16 %v2901
        %v2935 = vunpack.c.h.b16 %v2901
        %v2936 = vunpack.c.l.b16 %v2902
        %v2937 = vunpack.c.h.b16 %v2902
        %v2938 = vunpack.c.l.b16 %v2903
        %v2939 = vunpack.c.h.b16 %v2903
        %v2940 = vunpack.c.l.b16 %v2904
        %v2941 = vunpack.c.h.b16 %v2904
        %v2942 = vunpack.c.l.b16 %v2905
        %v2943 = vunpack.c.h.b16 %v2905
        %v2944 = vunpack.c.l.b16 %v2906
        %v2945 = vunpack.c.h.b16 %v2906
        %v2946 = vunpack.c.l.b16 %v2907
        %v2947 = vunpack.c.h.b16 %v2907
        %v2948 = vunpack.c.l.b16 %v2908
        %v2949 = vunpack.c.h.b16 %v2908
        %v2950 = vunpack.c.l.b16 %v2909
        %v2951 = vunpack.c.h.b16 %v2909
        %v2952 = vunpack.c.l.b16 %v2910
        %v2953 = vunpack.c.h.b16 %v2910
        %v2954 = vunpack.c.l.b16 %v2911
        %v2955 = vunpack.c.h.b16 %v2911
        %v2956 = vunpack.c.l.b16 %v2912
        %v2957 = vunpack.c.h.b16 %v2912
        %v2958 = vunpack.c.l.b16 %v2913
        %v2959 = vunpack.c.h.b16 %v2913
        %v2960 = vunpack.c.l.b16 %v2914
        %v2961 = vunpack.c.h.b16 %v2914
        %v2962 = vunpack.c.l.b16 %v2915
        %v2963 = vunpack.c.h.b16 %v2915
        %v2964 = vpack.c.b16 %v2932, %v2932
        %v2965 = vpack.c.b16 %v2933, %v2933
        %v2966 = vpack.c.b16 %v2934, %v2934
        %v2967 = vpack.c.b16 %v2935, %v2935
        %v2968 = vpack.c.b16 %v2936, %v2936
        %v2969 = vpack.c.b16 %v2937, %v2937
        %v2970 = vpack.c.b16 %v2938, %v2938
        %v2971 = vpack.c.b16 %v2939, %v2939
        %v2972 = vpack.c.b16 %v2940, %v2940
        %v2973 = vpack.c.b16 %v2941, %v2941
        %v2974 = vpack.c.b16 %v2942, %v2942
        %v2975 = vpack.c.b16 %v2943, %v2943
        %v2976 = vpack.c.b16 %v2944, %v2944
        %v2977 = vpack.c.b16 %v2945, %v2945
        %v2978 = vpack.c.b16 %v2946, %v2946
        %v2979 = vpack.c.b16 %v2947, %v2947
        %v2980 = vpack.c.b16 %v2948, %v2948
        %v2981 = vpack.c.b16 %v2949, %v2949
        %v2982 = vpack.c.b16 %v2950, %v2950
        %v2983 = vpack.c.b16 %v2951, %v2951
        %v2984 = vpack.c.b16 %v2952, %v2952
        %v2985 = vpack.c.b16 %v2953, %v2953
        %v2986 = vpack.c.b16 %v2954, %v2954
        %v2987 = vpack.c.b16 %v2955, %v2955
        %v2988 = vpack.c.b16 %v2956, %v2956
        %v2989 = vpack.c.b16 %v2957, %v2957
        %v2990 = vpack.c.b16 %v2958, %v2958
        %v2991 = vpack.c.b16 %v2959, %v2959
        %v2992 = vpack.c.b16 %v2960, %v2960
        %v2993 = vpack.c.b16 %v2961, %v2961
        %v2994 = vpack.c.b16 %v2962, %v2962
        %v2995 = vpack.c.b16 %v2963, %v2963
        %3028 = vst [vmem:[%s307] sm:$0xf] %v2964
        %3029 = vst [vmem:[%s307 + $0x4] sm:$0xf] %v2965
        %3030 = vst [vmem:[%s307 + $0x8] sm:$0xf] %v2966
        %3031 = vst [vmem:[%s307 + $0xc] sm:$0xf] %v2967
        %3032 = vst [vmem:[%s307 + $0x10] sm:$0xf] %v2968
        %3033 = vst [vmem:[%s307 + $0x14] sm:$0xf] %v2969
        %3034 = vst [vmem:[%s307 + $0x18] sm:$0xf] %v2970
        %3035 = vst [vmem:[%s307 + $0x1c] sm:$0xf] %v2971
        %3036 = vst [vmem:[%s307 + $0x20] sm:$0xf] %v2972
        %3037 = vst [vmem:[%s307 + $0x24] sm:$0xf] %v2973
        %3038 = vst [vmem:[%s307 + $0x28] sm:$0xf] %v2974
        %3039 = vst [vmem:[%s307 + $0x2c] sm:$0xf] %v2975
        %3040 = vst [vmem:[%s307 + $0x30] sm:$0xf] %v2976
        %3041 = vst [vmem:[%s307 + $0x34] sm:$0xf] %v2977
        %3042 = vst [vmem:[%s307 + $0x38] sm:$0xf] %v2978
        %3043 = vst [vmem:[%s307 + $0x3c] sm:$0xf] %v2979
        %3044 = vst [vmem:[%s307 + $0x40] sm:$0xf] %v2980
        %3045 = vst [vmem:[%s307 + $0x44] sm:$0xf] %v2981
        %3046 = vst [vmem:[%s307 + $0x48] sm:$0xf] %v2982
        %3047 = vst [vmem:[%s307 + $0x4c] sm:$0xf] %v2983
        %3048 = vst [vmem:[%s307 + $0x50] sm:$0xf] %v2984
        %3049 = vst [vmem:[%s307 + $0x54] sm:$0xf] %v2985
        %3050 = vst [vmem:[%s307 + $0x58] sm:$0xf] %v2986
        %3051 = vst [vmem:[%s307 + $0x5c] sm:$0xf] %v2987
        %3052 = vst [vmem:[%s307 + $0x60] sm:$0xf] %v2988
        %3053 = vst [vmem:[%s307 + $0x64] sm:$0xf] %v2989
        %3054 = vst [vmem:[%s307 + $0x68] sm:$0xf] %v2990
        %3055 = vst [vmem:[%s307 + $0x6c] sm:$0xf] %v2991
        %3056 = vst [vmem:[%s307 + $0x70] sm:$0xf] %v2992
        %3057 = vst [vmem:[%s307 + $0x74] sm:$0xf] %v2993
        %3058 = vst [vmem:[%s307 + $0x78] sm:$0xf] %v2994
        %3059 = vst [vmem:[%s307 + $0x7c] sm:$0xf] %v2995
        %s3060 = sand.u32 %s148, 1
        %s3061 = scalar_lea.sflag [#allocation5], %s3060
        %s3062 = sand.u32 %s148, 1
        %s3063 = smul.addr %s3062, 128
        %s3064 = scalar_lea.vmem [#allocation9], %s3063
        // Predicated region
        $region49: #{tpu_custom_call.1} parent=35 // pred_check
          %p3065 = pneg %p158
        $region50: #{tpu_custom_call.1} parent=35 // pred_check_branch
          %3067 = sbr.rel (%p3065) target = $region52
        $region51: #{tpu_custom_call.1} parent=35 // pred_region
          %s3068 = smul.u32 16, %s28
          %s3070 = ssub.s32 2048, 2048
          %3071 = vsyncadd %s3061, %s3070
          %s3072 = smul.addr %s3068, 2
          %s3073 = smul.addr %s29, 32
          %s3074 = sadd.s32 %s3072, %s3073
          %s3075 = smul.addr %s3074, 64
          %s3076 = scalar_lea.hbm %s4, %s3075
          %s3077 = sshll.u32 %s3064, 4
          %s3078 = int_to_ptr.vmem [resolvable:$true] %s3077
          %3083 = dma.vmem_to_hbm [thread:$0]  %s3078, 2048, %s3076, %s3061, 64, 64, 4
        $region52: #{tpu_custom_call.1} parent=35 // pred_fallthru
          _
      $region36: #{tpu_custom_call.1} parent=5 // pred_fallthru
        _
      %p3084 = scmp.le.s32.totalorder 2, %s19
      // Predicated region
      $region53: #{tpu_custom_call.1} parent=5 // pred_check
        %p3085 = pneg %p3084
      $region54: #{tpu_custom_call.1} parent=5 // pred_check_branch
        %3087 = sbr.rel (%p3085) target = $region56
      $region55: #{tpu_custom_call.1} parent=5 // pred_region
        %s3088 = ssub.s32 %s19, 2
        // Predicated region
        $region57: #{tpu_custom_call.1} parent=55 // pred_check
          %p3089 = pneg %p164
        $region58: #{tpu_custom_call.1} parent=55 // pred_check_branch
          %3091 = sbr.rel (%p3089) target = $region60
        $region59: #{tpu_custom_call.1} parent=55 // pred_region
          %s3092 = sand.u32 %s149, 1
          %s3093 = scalar_lea.sflag [#allocation5], %s3092
          %s3094 = sand.u32 %s149, 1
          %s3095 = smul.addr %s3094, 128
          %s3096 = scalar_lea.vmem [#allocation9], %s3095
          %3097 = dma.done %s3093, 2048
        $region60: #{tpu_custom_call.1} parent=55 // pred_fallthru
          _
      $region56: #{tpu_custom_call.1} parent=5 // pred_fallthru
        _
    $region6: #{tpu_custom_call.1} parent=1 // loop_footer
      %s23 = sadd.s32 1, %s19
    $region7: #{tpu_custom_call.1} parent=1 // loop_footer_branch
      %18 = sbr.rel target = $region3
    $region8: #{tpu_custom_call.1} parent=1 // loop_exit
      _
    %3098 = vsyncpa [#allocation4], 1
    %s3099 = scalar_lea.sflag [#allocation4], 1
    %3100 = vsyncpa %s3099, 1
    %3101 = vsyncpa [#allocation7], 1
    %s3102 = scalar_lea.sflag [#allocation7], 1
    %3103 = vsyncpa %s3102, 1
    %3104 = vsyncpa [#allocation5], 1
    %s3105 = scalar_lea.sflag [#allocation5], 1
    %3106 = vsyncpa %s3105, 1

</llo_original>
